<compile_context>
chip_gen: v7x
topology: tpu7x:2x2x1
jax: 0.10.0
libtpu: 0.0.40
codegen_flags: <defaults>
</compile_context>

<pallas_src>
import math

import jax
import jax.numpy as jnp
from jax.experimental import pallas as pl
from jax.experimental.pallas import tpu as pltpu

# ---------------- synthetic ESM config (small shapes) ----------------
B = 2            # batch
SEQ = 8          # residues per sequence (n)
D = 32           # embed_dim (dpe)
NH = 4           # attention heads
HD = D // NH     # head dim
FFN = 4 * D      # feed-forward hidden
REPR_LAYER = 2   # number of transformer layers == requested repr layer
T = SEQ + 2      # tokens per sequence after BOS/CLS + EOS (ESM batch_converter)
M = B * T        # rows per matmul (batch * tokens) -- whole batch in one block

# synthetic alphabet (deterministic): 4 special tokens + 21 restypes (20 AA + 'X')
CLS_TOK, PAD_TOK, EOS_TOK, MASK_TOK = 0, 1, 2, 3
N_RESTYPES = 21
VOCAB = 4 + N_RESTYPES


# ---------------- in-kernel helpers ----------------
def _layer_norm(h, g, b, eps=1e-5):
    mu = jnp.mean(h, axis=-1, keepdims=True)
    var = jnp.mean((h - mu) ** 2, axis=-1, keepdims=True)
    return (h - mu) * jax.lax.rsqrt(var + eps) * g + b


def _gelu(x):
    # TODO(synk): real ESM uses erf-GELU; tanh approximation lowers cleanly on the EUP.
    c = math.sqrt(2.0 / math.pi)
    return 0.5 * x * (1.0 + jnp.tanh(c * (x + 0.044715 * x * x * x)))


# ---------------- fused Pallas kernel ----------------
def fused_esm_kernel(x_ref, bias_ref,
                     ln1g, ln1b, wqkv, bqkv, wo, bo,
                     ln2g, ln2b, w1, b1, w2, b2,
                     lnfg, lnfb,
                     o_ref, acc_ref):
    """One grid step == one transformer layer applied to the whole [B*T, D] batch.

    The activation is carried across layers in `acc_ref` (VMEM scratch); the
    final layer norm + output store run only on the last grid step.
    `bias_ref` holds an additive block-diagonal mask so attention never mixes
    sequences even though the batch is flattened to [B*T, D].
    """
    l = pl.program_id(0)

    @pl.when(l == 0)
    def _():
        acc_ref[...] = x_ref[...]

    x = acc_ref[...]                                   # [M, D]
    bias = bias_ref[...]                               # [M, M]

    # ---- pre-LN multi-head self-attention (fused QKV; 1/sqrt(HD) folded into Wq) ----
    h = _layer_norm(x, ln1g[0], ln1b[0])
    qkv = jnp.dot(h, wqkv[0], preferred_element_type=jnp.float32) + bqkv[0]  # [M, 3D]
    q, k, v = qkv[:, :D], qkv[:, D:2 * D], qkv[:, 2 * D:]

    ctxs = []
    for hh in range(NH):                               # static loop over heads
        sl = slice(hh * HD, (hh + 1) * HD)
        s = jnp.dot(q[:, sl], k[:, sl].T, preferred_element_type=jnp.float32) + bias
        s = s - jnp.max(s, axis=-1, keepdims=True)
        p = jnp.exp(s)
        p = p * pl.reciprocal(jnp.sum(p, axis=-1, keepdims=True), approx=True)
        ctxs.append(jnp.dot(p, v[:, sl], preferred_element_type=jnp.float32))
    ctx = jnp.concatenate(ctxs, axis=-1)               # [M, D]
    x = x + jnp.dot(ctx, wo[0], preferred_element_type=jnp.float32) + bo[0]

    # ---- pre-LN feed-forward ----
    h = _layer_norm(x, ln2g[0], ln2b[0])
    h = jnp.dot(h, w1[0], preferred_element_type=jnp.float32) + b1[0]
    h = _gelu(h)
    x = x + jnp.dot(h, w2[0], preferred_element_type=jnp.float32) + b2[0]

    acc_ref[...] = x

    @pl.when(l == pl.num_programs(0) - 1)
    def _():
        o_ref[...] = _layer_norm(x, lnfg[...], lnfb[...])


# ---------------- pallas_call wrapper ----------------
def _const_spec(shape):
    zeros = (0,) * len(shape)
    return pl.BlockSpec(shape, lambda l: zeros)


def _layer_spec(per_layer_shape):
    zeros = (0,) * len(per_layer_shape)
    return pl.BlockSpec((1,) + tuple(per_layer_shape), lambda l: (l,) + zeros)


def _run_fused(x, bias, p):
    in_specs = [
        _const_spec((M, D)),                                # x (used at layer 0)
        _const_spec((M, M)),                                # block-diag attention bias
        _layer_spec((1, D)), _layer_spec((1, D)),           # ln1 gamma/beta
        _layer_spec((D, 3 * D)), _layer_spec((1, 3 * D)),   # fused Wqkv, bqkv
        _layer_spec((D, D)), _layer_spec((1, D)),           # Wo, bo
        _layer_spec((1, D)), _layer_spec((1, D)),           # ln2 gamma/beta
        _layer_spec((D, FFN)), _layer_spec((1, FFN)),       # W1, b1
        _layer_spec((FFN, D)), _layer_spec((1, D)),         # W2, b2
        _const_spec((1, D)), _const_spec((1, D)),           # final LN gamma/beta
    ]
    # TODO(synk): at real ESM scale (D=1280, FFN=5120) cast weights to bf16 and tile
    # the FFN matmuls over a K/N grid axis so per-layer weights fit v7x's 64 MiB VMEM.
    return pl.pallas_call(
        fused_esm_kernel,
        out_shape=jax.ShapeDtypeStruct((M, D), jnp.float32),
        grid_spec=pltpu.PrefetchScalarGridSpec(
            num_scalar_prefetch=0,
            grid=(REPR_LAYER,),
            in_specs=in_specs,
            out_specs=_const_spec((M, D)),
            scratch_shapes=[pltpu.VMEM((M, D), jnp.float32)]),
        compiler_params=pltpu.CompilerParams(
            dimension_semantics=("arbitrary",)),   # layers have a sequential dependency
    )(x, bias, p["ln1_g"], p["ln1_b"], p["wqkv"], p["bqkv"], p["wo"], p["bo"],
      p["ln2_g"], p["ln2_b"], p["w1"], p["b1"], p["w2"], p["b2"],
      p["lnf_g"], p["lnf_b"])


# ---------------- parameter init (deterministic, synthetic) ----------------
def init_params(key):
    ks = jax.random.split(key, 8)
    w = lambda k, s: 0.02 * jax.random.normal(k, s, jnp.float32)
    L = REPR_LAYER
    scale = 1.0 / math.sqrt(HD)
    # Fold the attention scale into Wq (bq is zero, so no bias scaling needed).
    wq = w(ks[2], (L, D, D)) * scale
    wk = w(ks[3], (L, D, D))
    wv = w(ks[4], (L, D, D))
    return dict(
        embed=w(ks[0], (VOCAB, D)),
        pos=w(ks[1], (T, D)),
        ln1_g=jnp.ones((L, 1, D), jnp.float32), ln1_b=jnp.zeros((L, 1, D), jnp.float32),
        wqkv=jnp.concatenate([wq, wk, wv], axis=-1),          # [L, D, 3D] fused QKV
        bqkv=jnp.zeros((L, 1, 3 * D), jnp.float32),
        wo=w(ks[5], (L, D, D)), bo=jnp.zeros((L, 1, D), jnp.float32),
        ln2_g=jnp.ones((L, 1, D), jnp.float32), ln2_b=jnp.zeros((L, 1, D), jnp.float32),
        w1=w(ks[6], (L, D, FFN)), b1=jnp.zeros((L, 1, FFN), jnp.float32),
        w2=w(ks[7], (L, FFN, D)), b2=jnp.zeros((L, 1, D), jnp.float32),
        lnf_g=jnp.ones((1, D), jnp.float32), lnf_b=jnp.zeros((1, D), jnp.float32),
    )


# ---------------- forward (glue in JAX, hot path in one Pallas kernel) ----------------
def tokenize(aa_ids):
    """Mimic ESM batch_converter: residue idx -> token id, -1 -> mask,
    prepend CLS/BOS, append EOS."""
    tok = jnp.where(aa_ids < 0, MASK_TOK, aa_ids + 4).astype(jnp.int32)
    cls = jnp.full((aa_ids.shape[0], 1), CLS_TOK, jnp.int32)
    eos = jnp.full((aa_ids.shape[0], 1), EOS_TOK, jnp.int32)
    return jnp.concatenate([cls, tok, eos], axis=1)            # [B, T]


def make_attn_bias():
    """Additive block-diagonal mask so flattened-batch attention stays per-sequence."""
    seq_id = jnp.arange(M, dtype=jnp.int32) // T
    same = seq_id[:, None] == seq_id[None, :]
    return jnp.where(same, 0.0, -1e9).astype(jnp.float32)      # [M, M]


@jax.jit
def esm_wrapper_forward(aa_ids, params):
    tokens = tokenize(aa_ids)                                   # [B, T]
    x = jnp.take(params["embed"], tokens, axis=0)               # [B, T, D]
    # TODO(synk): real ESM-2 applies rotary position embeddings inside attention.
    x = x + params["pos"][None]                                 # learned pos emb
    x = x.reshape(M, D)                                         # whole batch, one block
    out = _run_fused(x, make_attn_bias(), params)               # [M, D]
    out = out.reshape(B, T, D)
    # embeddings[:, 1:seq_len+1]  -> drop BOS, keep SEQ positions
    return out[:, 1:SEQ + 1]                                    # [B, SEQ, D]


if __name__ == "__main__":
    key = jax.random.PRNGKey(0)
    k_param, k_ids = jax.random.split(key)
    params = init_params(k_param)
    # residue indices in [0, 20], with a couple of -1 (mask) entries
    aa_ids = jax.random.randint(k_ids, (B, SEQ), 0, N_RESTYPES, dtype=jnp.int32)
    aa_ids = aa_ids.at[0, 2].set(-1).at[1, 5].set(-1)

    out = jax.block_until_ready(esm_wrapper_forward(aa_ids, params))

    assert out.shape == (B, SEQ, D), out.shape
    assert out.dtype == jnp.float32
    assert bool(jnp.all(jnp.isfinite(out)))
    print("KERNEL_OK")
</pallas_src>

<mosaic_0001>
module attributes {stable_mosaic.version = 11 : i64} {
  func.func @fused_esm_kernel(%arg0: i32, %arg1: memref<20x32xf32, #tpu.memory_space<vmem>>, %arg2: memref<20x20xf32, #tpu.memory_space<vmem>>, %arg3: memref<1x1x32xf32, #tpu.memory_space<vmem>>, %arg4: memref<1x1x32xf32, #tpu.memory_space<vmem>>, %arg5: memref<1x32x96xf32, #tpu.memory_space<vmem>>, %arg6: memref<1x1x96xf32, #tpu.memory_space<vmem>>, %arg7: memref<1x32x32xf32, #tpu.memory_space<vmem>>, %arg8: memref<1x1x32xf32, #tpu.memory_space<vmem>>, %arg9: memref<1x1x32xf32, #tpu.memory_space<vmem>>, %arg10: memref<1x1x32xf32, #tpu.memory_space<vmem>>, %arg11: memref<1x32x128xf32, #tpu.memory_space<vmem>>, %arg12: memref<1x1x128xf32, #tpu.memory_space<vmem>>, %arg13: memref<1x128x32xf32, #tpu.memory_space<vmem>>, %arg14: memref<1x1x32xf32, #tpu.memory_space<vmem>>, %arg15: memref<1x32xf32, #tpu.memory_space<vmem>>, %arg16: memref<1x32xf32, #tpu.memory_space<vmem>>, %arg17: memref<20x32xf32, #tpu.memory_space<vmem>>, %arg18: memref<20x32xf32, #tpu.memory_space<vmem>>) attributes {dimension_semantics = [#tpu.dimension_semantics<arbitrary>], iteration_bounds = array<i64: 2>, scalar_prefetch = 0 : i64, scratch_operands = 1 : i64, tpu.core_type = #tpu.core_type<tc>, window_params = [{pipeline_mode = #tpu.pipeline_mode<synchronous>, transform_indices = @transform_0, window_bounds = array<i64: 20, 32>}, {pipeline_mode = #tpu.pipeline_mode<synchronous>, transform_indices = @transform_1, window_bounds = array<i64: 20, 20>}, {transform_indices = @transform_2, window_bounds = array<i64: 1, 1, 32>}, {transform_indices = @transform_3, window_bounds = array<i64: 1, 1, 32>}, {transform_indices = @transform_4, window_bounds = array<i64: 1, 32, 96>}, {transform_indices = @transform_5, window_bounds = array<i64: 1, 1, 96>}, {transform_indices = @transform_6, window_bounds = array<i64: 1, 32, 32>}, {transform_indices = @transform_7, window_bounds = array<i64: 1, 1, 32>}, {transform_indices = @transform_8, window_bounds = array<i64: 1, 1, 32>}, {transform_indices = @transform_9, window_bounds = array<i64: 1, 1, 32>}, {transform_indices = @transform_10, window_bounds = array<i64: 1, 32, 128>}, {transform_indices = @transform_11, window_bounds = array<i64: 1, 1, 128>}, {transform_indices = @transform_12, window_bounds = array<i64: 1, 128, 32>}, {transform_indices = @transform_13, window_bounds = array<i64: 1, 1, 32>}, {pipeline_mode = #tpu.pipeline_mode<synchronous>, transform_indices = @transform_14, window_bounds = array<i64: 1, 32>}, {pipeline_mode = #tpu.pipeline_mode<synchronous>, transform_indices = @transform_15, window_bounds = array<i64: 1, 32>}, {pipeline_mode = #tpu.pipeline_mode<synchronous>, transform_indices = @transform_16, window_bounds = array<i64: 20, 32>}]} {
    %c0_i32 = arith.constant 0 : i32
    %0 = arith.cmpi eq, %arg0, %c0_i32 : i32
    %1 = arith.extui %0 : i1 to i32
    %c0_i32_0 = arith.constant 0 : i32
    %2 = arith.cmpi ne, %1, %c0_i32_0 : i32
    scf.if %2 {
      %c0_76 = arith.constant 0 : index
      %c0_77 = arith.constant 0 : index
      %176 = vector.load %arg1[%c0_76, %c0_77] : memref<20x32xf32, #tpu.memory_space<vmem>>, vector<20x32xf32>
      %c0_78 = arith.constant 0 : index
      %c0_79 = arith.constant 0 : index
      %177 = vector.load %arg18[%c0_78, %c0_79] : memref<20x32xf32, #tpu.memory_space<vmem>>, vector<20x32xf32>
      tpu.vector_store %arg18[%c0_78, %c0_79], %176 {strides = array<i32>} : memref<20x32xf32, #tpu.memory_space<vmem>>, vector<20x32xf32>,
    } else {
    }
    %c0 = arith.constant 0 : index
    %c0_1 = arith.constant 0 : index
    %3 = vector.load %arg18[%c0, %c0_1] : memref<20x32xf32, #tpu.memory_space<vmem>>, vector<20x32xf32>
    %c0_2 = arith.constant 0 : index
    %c0_3 = arith.constant 0 : index
    %4 = vector.load %arg2[%c0_2, %c0_3] : memref<20x20xf32, #tpu.memory_space<vmem>>, vector<20x20xf32>
    %c0_4 = arith.constant 0 : index
    %c0_5 = arith.constant 0 : index
    %c0_6 = arith.constant 0 : index
    %5 = vector.load %arg3[%c0_4, %c0_5, %c0_6] : memref<1x1x32xf32, #tpu.memory_space<vmem>>, vector<1x1x32xf32>
    %6 = vector.shape_cast %5 : vector<1x1x32xf32> to vector<1x32xf32>
    %c0_7 = arith.constant 0 : index
    %c0_8 = arith.constant 0 : index
    %c0_9 = arith.constant 0 : index
    %7 = vector.load %arg4[%c0_7, %c0_8, %c0_9] : memref<1x1x32xf32, #tpu.memory_space<vmem>>, vector<1x1x32xf32>
    %8 = vector.shape_cast %7 : vector<1x1x32xf32> to vector<1x32xf32>
    %cst = arith.constant dense<0.000000e+00> : vector<20xf32>
    %9 = vector.multi_reduction <add>, %3, %cst [1] : vector<20x32xf32> to vector<20xf32>
    %10 = vector.shape_cast %9 : vector<20xf32> to vector<20x1xf32>
    %cst_10 = arith.constant 3.200000e+01 : f32
    %11 = vector.broadcast %cst_10 : f32 to vector<20x1xf32>
    %12 = arith.divf %10, %11 : vector<20x1xf32>
    %13 = vector.broadcast %12 : vector<20x1xf32> to vector<20x32xf32>
    %14 = arith.subf %3, %13 : vector<20x32xf32>
    %15 = arith.mulf %14, %14 : vector<20x32xf32>
    %cst_11 = arith.constant dense<0.000000e+00> : vector<20xf32>
    %16 = vector.multi_reduction <add>, %15, %cst_11 [1] : vector<20x32xf32> to vector<20xf32>
    %17 = vector.shape_cast %16 : vector<20xf32> to vector<20x1xf32>
    %cst_12 = arith.constant 3.200000e+01 : f32
    %18 = vector.broadcast %cst_12 : f32 to vector<20x1xf32>
    %19 = arith.divf %17, %18 : vector<20x1xf32>
    %20 = vector.broadcast %12 : vector<20x1xf32> to vector<20x32xf32>
    %21 = arith.subf %3, %20 : vector<20x32xf32>
    %cst_13 = arith.constant 9.99999974E-6 : f32
    %22 = vector.broadcast %cst_13 : f32 to vector<20x1xf32>
    %23 = arith.addf %19, %22 : vector<20x1xf32>
    %24 = math.rsqrt %23 : vector<20x1xf32>
    %25 = vector.broadcast %24 : vector<20x1xf32> to vector<20x32xf32>
    %26 = arith.mulf %21, %25 : vector<20x32xf32>
    %27 = vector.broadcast %6 : vector<1x32xf32> to vector<20x32xf32>
    %28 = arith.mulf %26, %27 : vector<20x32xf32>
    %29 = vector.broadcast %8 : vector<1x32xf32> to vector<20x32xf32>
    %30 = arith.addf %28, %29 : vector<20x32xf32>
    %c0_14 = arith.constant 0 : index
    %c0_15 = arith.constant 0 : index
    %c0_16 = arith.constant 0 : index
    %31 = vector.load %arg5[%c0_14, %c0_15, %c0_16] : memref<1x32x96xf32, #tpu.memory_space<vmem>>, vector<1x32x96xf32>
    %32 = vector.shape_cast %31 : vector<1x32x96xf32> to vector<32x96xf32>
    %cst_17 = arith.constant dense<0.000000e+00> : vector<20x96xf32>
    %33 = tpu.matmul %30, %32, %cst_17 {dimension_numbers = #tpu.dot_dimension_numbers<[1], [0], [0], [1], [0, 0, 1, 1], [], []>} : vector<20x32xf32>, vector<32x96xf32>, vector<20x96xf32> -> vector<20x96xf32>
    %c0_18 = arith.constant 0 : index
    %c0_19 = arith.constant 0 : index
    %c0_20 = arith.constant 0 : index
    %34 = vector.load %arg6[%c0_18, %c0_19, %c0_20] : memref<1x1x96xf32, #tpu.memory_space<vmem>>, vector<1x1x96xf32>
    %35 = vector.shape_cast %34 : vector<1x1x96xf32> to vector<1x96xf32>
    %36 = vector.broadcast %35 : vector<1x96xf32> to vector<20x96xf32>
    %37 = arith.addf %33, %36 : vector<20x96xf32>
    %38 = vector.extract_strided_slice %37 {offsets = [0, 0], sizes = [20, 32], strides = [1, 1]} : vector<20x96xf32> to vector<20x32xf32>
    %39 = vector.extract_strided_slice %37 {offsets = [0, 32], sizes = [20, 32], strides = [1, 1]} : vector<20x96xf32> to vector<20x32xf32>
    %40 = vector.extract_strided_slice %37 {offsets = [0, 64], sizes = [20, 32], strides = [1, 1]} : vector<20x96xf32> to vector<20x32xf32>
    %41 = vector.extract_strided_slice %38 {offsets = [0, 0], sizes = [20, 8], strides = [1, 1]} : vector<20x32xf32> to vector<20x8xf32>
    %42 = vector.extract_strided_slice %39 {offsets = [0, 0], sizes = [20, 8], strides = [1, 1]} : vector<20x32xf32> to vector<20x8xf32>
    %43 = tpu.transpose %42, [1, 0] : vector<20x8xf32> -> vector<8x20xf32>
    %cst_21 = arith.constant dense<0.000000e+00> : vector<20x20xf32>
    %44 = tpu.matmul %41, %43, %cst_21 {dimension_numbers = #tpu.dot_dimension_numbers<[1], [0], [0], [1], [0, 0, 1, 1], [], []>} : vector<20x8xf32>, vector<8x20xf32>, vector<20x20xf32> -> vector<20x20xf32>
    %45 = arith.addf %44, %4 : vector<20x20xf32>
    %cst_22 = arith.constant dense<0xFF800000> : vector<20xf32>
    %46 = vector.multi_reduction <maximumf>, %45, %cst_22 [1] : vector<20x20xf32> to vector<20xf32>
    %47 = vector.shape_cast %46 : vector<20xf32> to vector<20x1xf32>
    %48 = vector.broadcast %47 : vector<20x1xf32> to vector<20x20xf32>
    %49 = arith.subf %45, %48 : vector<20x20xf32>
    %50 = math.exp %49 : vector<20x20xf32>
    %cst_23 = arith.constant dense<0.000000e+00> : vector<20xf32>
    %51 = vector.multi_reduction <add>, %50, %cst_23 [1] : vector<20x20xf32> to vector<20xf32>
    %52 = vector.shape_cast %51 : vector<20xf32> to vector<20x1xf32>
    %53 = tpu.reciprocal %52 {approx = true} : vector<20x1xf32> -> vector<20x1xf32>
    %54 = vector.broadcast %53 : vector<20x1xf32> to vector<20x20xf32>
    %55 = arith.mulf %50, %54 : vector<20x20xf32>
    %56 = vector.extract_strided_slice %40 {offsets = [0, 0], sizes = [20, 8], strides = [1, 1]} : vector<20x32xf32> to vector<20x8xf32>
    %cst_24 = arith.constant dense<0.000000e+00> : vector<20x8xf32>
    %57 = tpu.matmul %55, %56, %cst_24 {dimension_numbers = #tpu.dot_dimension_numbers<[1], [0], [0], [1], [0, 0, 1, 1], [], []>} : vector<20x20xf32>, vector<20x8xf32>, vector<20x8xf32> -> vector<20x8xf32>
    %58 = vector.extract_strided_slice %38 {offsets = [0, 8], sizes = [20, 8], strides = [1, 1]} : vector<20x32xf32> to vector<20x8xf32>
    %59 = vector.extract_strided_slice %39 {offsets = [0, 8], sizes = [20, 8], strides = [1, 1]} : vector<20x32xf32> to vector<20x8xf32>
    %60 = tpu.transpose %59, [1, 0] : vector<20x8xf32> -> vector<8x20xf32>
    %cst_25 = arith.constant dense<0.000000e+00> : vector<20x20xf32>
    %61 = tpu.matmul %58, %60, %cst_25 {dimension_numbers = #tpu.dot_dimension_numbers<[1], [0], [0], [1], [0, 0, 1, 1], [], []>} : vector<20x8xf32>, vector<8x20xf32>, vector<20x20xf32> -> vector<20x20xf32>
    %62 = arith.addf %61, %4 : vector<20x20xf32>
    %cst_26 = arith.constant dense<0xFF800000> : vector<20xf32>
    %63 = vector.multi_reduction <maximumf>, %62, %cst_26 [1] : vector<20x20xf32> to vector<20xf32>
    %64 = vector.shape_cast %63 : vector<20xf32> to vector<20x1xf32>
    %65 = vector.broadcast %64 : vector<20x1xf32> to vector<20x20xf32>
    %66 = arith.subf %62, %65 : vector<20x20xf32>
    %67 = math.exp %66 : vector<20x20xf32>
    %cst_27 = arith.constant dense<0.000000e+00> : vector<20xf32>
    %68 = vector.multi_reduction <add>, %67, %cst_27 [1] : vector<20x20xf32> to vector<20xf32>
    %69 = vector.shape_cast %68 : vector<20xf32> to vector<20x1xf32>
    %70 = tpu.reciprocal %69 {approx = true} : vector<20x1xf32> -> vector<20x1xf32>
    %71 = vector.broadcast %70 : vector<20x1xf32> to vector<20x20xf32>
    %72 = arith.mulf %67, %71 : vector<20x20xf32>
    %73 = vector.extract_strided_slice %40 {offsets = [0, 8], sizes = [20, 8], strides = [1, 1]} : vector<20x32xf32> to vector<20x8xf32>
    %cst_28 = arith.constant dense<0.000000e+00> : vector<20x8xf32>
    %74 = tpu.matmul %72, %73, %cst_28 {dimension_numbers = #tpu.dot_dimension_numbers<[1], [0], [0], [1], [0, 0, 1, 1], [], []>} : vector<20x20xf32>, vector<20x8xf32>, vector<20x8xf32> -> vector<20x8xf32>
    %75 = vector.extract_strided_slice %38 {offsets = [0, 16], sizes = [20, 8], strides = [1, 1]} : vector<20x32xf32> to vector<20x8xf32>
    %76 = vector.extract_strided_slice %39 {offsets = [0, 16], sizes = [20, 8], strides = [1, 1]} : vector<20x32xf32> to vector<20x8xf32>
    %77 = tpu.transpose %76, [1, 0] : vector<20x8xf32> -> vector<8x20xf32>
    %cst_29 = arith.constant dense<0.000000e+00> : vector<20x20xf32>
    %78 = tpu.matmul %75, %77, %cst_29 {dimension_numbers = #tpu.dot_dimension_numbers<[1], [0], [0], [1], [0, 0, 1, 1], [], []>} : vector<20x8xf32>, vector<8x20xf32>, vector<20x20xf32> -> vector<20x20xf32>
    %79 = arith.addf %78, %4 : vector<20x20xf32>
    %cst_30 = arith.constant dense<0xFF800000> : vector<20xf32>
    %80 = vector.multi_reduction <maximumf>, %79, %cst_30 [1] : vector<20x20xf32> to vector<20xf32>
    %81 = vector.shape_cast %80 : vector<20xf32> to vector<20x1xf32>
    %82 = vector.broadcast %81 : vector<20x1xf32> to vector<20x20xf32>
    %83 = arith.subf %79, %82 : vector<20x20xf32>
    %84 = math.exp %83 : vector<20x20xf32>
    %cst_31 = arith.constant dense<0.000000e+00> : vector<20xf32>
    %85 = vector.multi_reduction <add>, %84, %cst_31 [1] : vector<20x20xf32> to vector<20xf32>
    %86 = vector.shape_cast %85 : vector<20xf32> to vector<20x1xf32>
    %87 = tpu.reciprocal %86 {approx = true} : vector<20x1xf32> -> vector<20x1xf32>
    %88 = vector.broadcast %87 : vector<20x1xf32> to vector<20x20xf32>
    %89 = arith.mulf %84, %88 : vector<20x20xf32>
    %90 = vector.extract_strided_slice %40 {offsets = [0, 16], sizes = [20, 8], strides = [1, 1]} : vector<20x32xf32> to vector<20x8xf32>
    %cst_32 = arith.constant dense<0.000000e+00> : vector<20x8xf32>
    %91 = tpu.matmul %89, %90, %cst_32 {dimension_numbers = #tpu.dot_dimension_numbers<[1], [0], [0], [1], [0, 0, 1, 1], [], []>} : vector<20x20xf32>, vector<20x8xf32>, vector<20x8xf32> -> vector<20x8xf32>
    %92 = vector.extract_strided_slice %38 {offsets = [0, 24], sizes = [20, 8], strides = [1, 1]} : vector<20x32xf32> to vector<20x8xf32>
    %93 = vector.extract_strided_slice %39 {offsets = [0, 24], sizes = [20, 8], strides = [1, 1]} : vector<20x32xf32> to vector<20x8xf32>
    %94 = tpu.transpose %93, [1, 0] : vector<20x8xf32> -> vector<8x20xf32>
    %cst_33 = arith.constant dense<0.000000e+00> : vector<20x20xf32>
    %95 = tpu.matmul %92, %94, %cst_33 {dimension_numbers = #tpu.dot_dimension_numbers<[1], [0], [0], [1], [0, 0, 1, 1], [], []>} : vector<20x8xf32>, vector<8x20xf32>, vector<20x20xf32> -> vector<20x20xf32>
    %96 = arith.addf %95, %4 : vector<20x20xf32>
    %cst_34 = arith.constant dense<0xFF800000> : vector<20xf32>
    %97 = vector.multi_reduction <maximumf>, %96, %cst_34 [1] : vector<20x20xf32> to vector<20xf32>
    %98 = vector.shape_cast %97 : vector<20xf32> to vector<20x1xf32>
    %99 = vector.broadcast %98 : vector<20x1xf32> to vector<20x20xf32>
    %100 = arith.subf %96, %99 : vector<20x20xf32>
    %101 = math.exp %100 : vector<20x20xf32>
    %cst_35 = arith.constant dense<0.000000e+00> : vector<20xf32>
    %102 = vector.multi_reduction <add>, %101, %cst_35 [1] : vector<20x20xf32> to vector<20xf32>
    %103 = vector.shape_cast %102 : vector<20xf32> to vector<20x1xf32>
    %104 = tpu.reciprocal %103 {approx = true} : vector<20x1xf32> -> vector<20x1xf32>
    %105 = vector.broadcast %104 : vector<20x1xf32> to vector<20x20xf32>
    %106 = arith.mulf %101, %105 : vector<20x20xf32>
    %107 = vector.extract_strided_slice %40 {offsets = [0, 24], sizes = [20, 8], strides = [1, 1]} : vector<20x32xf32> to vector<20x8xf32>
    %cst_36 = arith.constant dense<0.000000e+00> : vector<20x8xf32>
    %108 = tpu.matmul %106, %107, %cst_36 {dimension_numbers = #tpu.dot_dimension_numbers<[1], [0], [0], [1], [0, 0, 1, 1], [], []>} : vector<20x20xf32>, vector<20x8xf32>, vector<20x8xf32> -> vector<20x8xf32>
    %109 = tpu.concatenate %57, %74, %91, %108 in 1 : vector<20x8xf32>, vector<20x8xf32>, vector<20x8xf32>, vector<20x8xf32> -> vector<20x32xf32>
    %c0_37 = arith.constant 0 : index
    %c0_38 = arith.constant 0 : index
    %c0_39 = arith.constant 0 : index
    %110 = vector.load %arg7[%c0_37, %c0_38, %c0_39] : memref<1x32x32xf32, #tpu.memory_space<vmem>>, vector<1x32x32xf32>
    %111 = vector.shape_cast %110 : vector<1x32x32xf32> to vector<32x32xf32>
    %cst_40 = arith.constant dense<0.000000e+00> : vector<20x32xf32>
    %112 = tpu.matmul %109, %111, %cst_40 {dimension_numbers = #tpu.dot_dimension_numbers<[1], [0], [0], [1], [0, 0, 1, 1], [], []>} : vector<20x32xf32>, vector<32x32xf32>, vector<20x32xf32> -> vector<20x32xf32>
    %113 = arith.addf %3, %112 : vector<20x32xf32>
    %c0_41 = arith.constant 0 : index
    %c0_42 = arith.constant 0 : index
    %c0_43 = arith.constant 0 : index
    %114 = vector.load %arg8[%c0_41, %c0_42, %c0_43] : memref<1x1x32xf32, #tpu.memory_space<vmem>>, vector<1x1x32xf32>
    %115 = vector.shape_cast %114 : vector<1x1x32xf32> to vector<1x32xf32>
    %116 = vector.broadcast %115 : vector<1x32xf32> to vector<20x32xf32>
    %117 = arith.addf %113, %116 : vector<20x32xf32>
    %c0_44 = arith.constant 0 : index
    %c0_45 = arith.constant 0 : index
    %c0_46 = arith.constant 0 : index
    %118 = vector.load %arg9[%c0_44, %c0_45, %c0_46] : memref<1x1x32xf32, #tpu.memory_space<vmem>>, vector<1x1x32xf32>
    %119 = vector.shape_cast %118 : vector<1x1x32xf32> to vector<1x32xf32>
    %c0_47 = arith.constant 0 : index
    %c0_48 = arith.constant 0 : index
    %c0_49 = arith.constant 0 : index
    %120 = vector.load %arg10[%c0_47, %c0_48, %c0_49] : memref<1x1x32xf32, #tpu.memory_space<vmem>>, vector<1x1x32xf32>
    %121 = vector.shape_cast %120 : vector<1x1x32xf32> to vector<1x32xf32>
    %cst_50 = arith.constant dense<0.000000e+00> : vector<20xf32>
    %122 = vector.multi_reduction <add>, %117, %cst_50 [1] : vector<20x32xf32> to vector<20xf32>
    %123 = vector.shape_cast %122 : vector<20xf32> to vector<20x1xf32>
    %cst_51 = arith.constant 3.200000e+01 : f32
    %124 = vector.broadcast %cst_51 : f32 to vector<20x1xf32>
    %125 = arith.divf %123, %124 : vector<20x1xf32>
    %126 = vector.broadcast %125 : vector<20x1xf32> to vector<20x32xf32>
    %127 = arith.subf %117, %126 : vector<20x32xf32>
    %128 = arith.mulf %127, %127 : vector<20x32xf32>
    %cst_52 = arith.constant dense<0.000000e+00> : vector<20xf32>
    %129 = vector.multi_reduction <add>, %128, %cst_52 [1] : vector<20x32xf32> to vector<20xf32>
    %130 = vector.shape_cast %129 : vector<20xf32> to vector<20x1xf32>
    %cst_53 = arith.constant 3.200000e+01 : f32
    %131 = vector.broadcast %cst_53 : f32 to vector<20x1xf32>
    %132 = arith.divf %130, %131 : vector<20x1xf32>
    %133 = vector.broadcast %125 : vector<20x1xf32> to vector<20x32xf32>
    %134 = arith.subf %117, %133 : vector<20x32xf32>
    %cst_54 = arith.constant 9.99999974E-6 : f32
    %135 = vector.broadcast %cst_54 : f32 to vector<20x1xf32>
    %136 = arith.addf %132, %135 : vector<20x1xf32>
    %137 = math.rsqrt %136 : vector<20x1xf32>
    %138 = vector.broadcast %137 : vector<20x1xf32> to vector<20x32xf32>
    %139 = arith.mulf %134, %138 : vector<20x32xf32>
    %140 = vector.broadcast %119 : vector<1x32xf32> to vector<20x32xf32>
    %141 = arith.mulf %139, %140 : vector<20x32xf32>
    %142 = vector.broadcast %121 : vector<1x32xf32> to vector<20x32xf32>
    %143 = arith.addf %141, %142 : vector<20x32xf32>
    %c0_55 = arith.constant 0 : index
    %c0_56 = arith.constant 0 : index
    %c0_57 = arith.constant 0 : index
    %144 = vector.load %arg11[%c0_55, %c0_56, %c0_57] : memref<1x32x128xf32, #tpu.memory_space<vmem>>, vector<1x32x128xf32>
    %145 = vector.shape_cast %144 : vector<1x32x128xf32> to vector<32x128xf32>
    %cst_58 = arith.constant dense<0.000000e+00> : vector<20x128xf32>
    %146 = tpu.matmul %143, %145, %cst_58 {dimension_numbers = #tpu.dot_dimension_numbers<[1], [0], [0], [1], [0, 0, 1, 1], [], []>} : vector<20x32xf32>, vector<32x128xf32>, vector<20x128xf32> -> vector<20x128xf32>
    %c0_59 = arith.constant 0 : index
    %c0_60 = arith.constant 0 : index
    %c0_61 = arith.constant 0 : index
    %147 = vector.load %arg12[%c0_59, %c0_60, %c0_61] : memref<1x1x128xf32, #tpu.memory_space<vmem>>, vector<1x1x128xf32>
    %148 = vector.shape_cast %147 : vector<1x1x128xf32> to vector<1x128xf32>
    %149 = vector.broadcast %148 : vector<1x128xf32> to vector<20x128xf32>
    %150 = arith.addf %146, %149 : vector<20x128xf32>
    %cst_62 = arith.constant 5.000000e-01 : f32
    %151 = vector.broadcast %cst_62 : f32 to vector<20x128xf32>
    %152 = arith.mulf %151, %150 : vector<20x128xf32>
    %cst_63 = arith.constant 4.471500e-02 : f32
    %153 = vector.broadcast %cst_63 : f32 to vector<20x128xf32>
    %154 = arith.mulf %153, %150 : vector<20x128xf32>
    %155 = arith.mulf %154, %150 : vector<20x128xf32>
    %156 = arith.mulf %155, %150 : vector<20x128xf32>
    %157 = arith.addf %150, %156 : vector<20x128xf32>
    %cst_64 = arith.constant 0.797884583 : f32
    %158 = vector.broadcast %cst_64 : f32 to vector<20x128xf32>
    %159 = arith.mulf %158, %157 : vector<20x128xf32>
    %160 = math.tanh %159 : vector<20x128xf32>
    %cst_65 = arith.constant 1.000000e+00 : f32
    %161 = vector.broadcast %cst_65 : f32 to vector<20x128xf32>
    %162 = arith.addf %161, %160 : vector<20x128xf32>
    %163 = arith.mulf %152, %162 : vector<20x128xf32>
    %c0_66 = arith.constant 0 : index
    %c0_67 = arith.constant 0 : index
    %c0_68 = arith.constant 0 : index
    %164 = vector.load %arg13[%c0_66, %c0_67, %c0_68] : memref<1x128x32xf32, #tpu.memory_space<vmem>>, vector<1x128x32xf32>
    %165 = vector.shape_cast %164 : vector<1x128x32xf32> to vector<128x32xf32>
    %cst_69 = arith.constant dense<0.000000e+00> : vector<20x32xf32>
    %166 = tpu.matmul %163, %165, %cst_69 {dimension_numbers = #tpu.dot_dimension_numbers<[1], [0], [0], [1], [0, 0, 1, 1], [], []>} : vector<20x128xf32>, vector<128x32xf32>, vector<20x32xf32> -> vector<20x32xf32>
    %167 = arith.addf %117, %166 : vector<20x32xf32>
    %c0_70 = arith.constant 0 : index
    %c0_71 = arith.constant 0 : index
    %c0_72 = arith.constant 0 : index
    %168 = vector.load %arg14[%c0_70, %c0_71, %c0_72] : memref<1x1x32xf32, #tpu.memory_space<vmem>>, vector<1x1x32xf32>
    %169 = vector.shape_cast %168 : vector<1x1x32xf32> to vector<1x32xf32>
    %170 = vector.broadcast %169 : vector<1x32xf32> to vector<20x32xf32>
    %171 = arith.addf %167, %170 : vector<20x32xf32>
    %c0_73 = arith.constant 0 : index
    %c0_74 = arith.constant 0 : index
    %172 = vector.load %arg18[%c0_73, %c0_74] : memref<20x32xf32, #tpu.memory_space<vmem>>, vector<20x32xf32>
    tpu.vector_store %arg18[%c0_73, %c0_74], %171 {strides = array<i32>} : memref<20x32xf32, #tpu.memory_space<vmem>>, vector<20x32xf32>,
    %c1_i32 = arith.constant 1 : i32
    %173 = arith.cmpi eq, %arg0, %c1_i32 : i32
    %174 = arith.extui %173 : i1 to i32
    %c0_i32_75 = arith.constant 0 : i32
    %175 = arith.cmpi ne, %174, %c0_i32_75 : i32
    scf.if %175 {
      %c0_76 = arith.constant 0 : index
      %c0_77 = arith.constant 0 : index
      %176 = vector.load %arg15[%c0_76, %c0_77] : memref<1x32xf32, #tpu.memory_space<vmem>>, vector<1x32xf32>
      %c0_78 = arith.constant 0 : index
      %c0_79 = arith.constant 0 : index
      %177 = vector.load %arg16[%c0_78, %c0_79] : memref<1x32xf32, #tpu.memory_space<vmem>>, vector<1x32xf32>
      %cst_80 = arith.constant dense<0.000000e+00> : vector<20xf32>
      %178 = vector.multi_reduction <add>, %171, %cst_80 [1] : vector<20x32xf32> to vector<20xf32>
      %179 = vector.shape_cast %178 : vector<20xf32> to vector<20x1xf32>
      %cst_81 = arith.constant 3.200000e+01 : f32
      %180 = vector.broadcast %cst_81 : f32 to vector<20x1xf32>
      %181 = arith.divf %179, %180 : vector<20x1xf32>
      %182 = vector.broadcast %181 : vector<20x1xf32> to vector<20x32xf32>
      %183 = arith.subf %171, %182 : vector<20x32xf32>
      %184 = arith.mulf %183, %183 : vector<20x32xf32>
      %cst_82 = arith.constant dense<0.000000e+00> : vector<20xf32>
      %185 = vector.multi_reduction <add>, %184, %cst_82 [1] : vector<20x32xf32> to vector<20xf32>
      %186 = vector.shape_cast %185 : vector<20xf32> to vector<20x1xf32>
      %cst_83 = arith.constant 3.200000e+01 : f32
      %187 = vector.broadcast %cst_83 : f32 to vector<20x1xf32>
      %188 = arith.divf %186, %187 : vector<20x1xf32>
      %189 = vector.broadcast %181 : vector<20x1xf32> to vector<20x32xf32>
      %190 = arith.subf %171, %189 : vector<20x32xf32>
      %cst_84 = arith.constant 9.99999974E-6 : f32
      %191 = vector.broadcast %cst_84 : f32 to vector<20x1xf32>
      %192 = arith.addf %188, %191 : vector<20x1xf32>
      %193 = math.rsqrt %192 : vector<20x1xf32>
      %194 = vector.broadcast %193 : vector<20x1xf32> to vector<20x32xf32>
      %195 = arith.mulf %190, %194 : vector<20x32xf32>
      %196 = vector.broadcast %176 : vector<1x32xf32> to vector<20x32xf32>
      %197 = arith.mulf %195, %196 : vector<20x32xf32>
      %198 = vector.broadcast %177 : vector<1x32xf32> to vector<20x32xf32>
      %199 = arith.addf %197, %198 : vector<20x32xf32>
      %c0_85 = arith.constant 0 : index
      %c0_86 = arith.constant 0 : index
      %200 = vector.load %arg17[%c0_85, %c0_86] : memref<20x32xf32, #tpu.memory_space<vmem>>, vector<20x32xf32>
      tpu.vector_store %arg17[%c0_85, %c0_86], %199 {strides = array<i32>} : memref<20x32xf32, #tpu.memory_space<vmem>>, vector<20x32xf32>,
    } else {
    }
    return
  }
  func.func @transform_0(%arg0: i32) -> (i32, i32) {
    %c0_i32 = arith.constant 0 : i32
    %c0_i32_0 = arith.constant 0 : i32
    %c0_i32_1 = arith.constant 0 : i32
    return %c0_i32, %c0_i32_0 : i32, i32
  }
  func.func @transform_1(%arg0: i32) -> (i32, i32) {
    %c0_i32 = arith.constant 0 : i32
    %c0_i32_0 = arith.constant 0 : i32
    %c0_i32_1 = arith.constant 0 : i32
    return %c0_i32, %c0_i32_0 : i32, i32
  }
  func.func @transform_2(%arg0: i32) -> (i32, i32, i32) {
    %c0_i32 = arith.constant 0 : i32
    %c0_i32_0 = arith.constant 0 : i32
    %c0_i32_1 = arith.constant 0 : i32
    return %arg0, %c0_i32, %c0_i32_0 : i32, i32, i32
  }
  func.func @transform_3(%arg0: i32) -> (i32, i32, i32) {
    %c0_i32 = arith.constant 0 : i32
    %c0_i32_0 = arith.constant 0 : i32
    %c0_i32_1 = arith.constant 0 : i32
    return %arg0, %c0_i32, %c0_i32_0 : i32, i32, i32
  }
  func.func @transform_4(%arg0: i32) -> (i32, i32, i32) {
    %c0_i32 = arith.constant 0 : i32
    %c0_i32_0 = arith.constant 0 : i32
    %c0_i32_1 = arith.constant 0 : i32
    return %arg0, %c0_i32, %c0_i32_0 : i32, i32, i32
  }
  func.func @transform_5(%arg0: i32) -> (i32, i32, i32) {
    %c0_i32 = arith.constant 0 : i32
    %c0_i32_0 = arith.constant 0 : i32
    %c0_i32_1 = arith.constant 0 : i32
    return %arg0, %c0_i32, %c0_i32_0 : i32, i32, i32
  }
  func.func @transform_6(%arg0: i32) -> (i32, i32, i32) {
    %c0_i32 = arith.constant 0 : i32
    %c0_i32_0 = arith.constant 0 : i32
    %c0_i32_1 = arith.constant 0 : i32
    return %arg0, %c0_i32, %c0_i32_0 : i32, i32, i32
  }
  func.func @transform_7(%arg0: i32) -> (i32, i32, i32) {
    %c0_i32 = arith.constant 0 : i32
    %c0_i32_0 = arith.constant 0 : i32
    %c0_i32_1 = arith.constant 0 : i32
    return %arg0, %c0_i32, %c0_i32_0 : i32, i32, i32
  }
  func.func @transform_8(%arg0: i32) -> (i32, i32, i32) {
    %c0_i32 = arith.constant 0 : i32
    %c0_i32_0 = arith.constant 0 : i32
    %c0_i32_1 = arith.constant 0 : i32
    return %arg0, %c0_i32, %c0_i32_0 : i32, i32, i32
  }
  func.func @transform_9(%arg0: i32) -> (i32, i32, i32) {
    %c0_i32 = arith.constant 0 : i32
    %c0_i32_0 = arith.constant 0 : i32
    %c0_i32_1 = arith.constant 0 : i32
    return %arg0, %c0_i32, %c0_i32_0 : i32, i32, i32
  }
  func.func @transform_10(%arg0: i32) -> (i32, i32, i32) {
    %c0_i32 = arith.constant 0 : i32
    %c0_i32_0 = arith.constant 0 : i32
    %c0_i32_1 = arith.constant 0 : i32
    return %arg0, %c0_i32, %c0_i32_0 : i32, i32, i32
  }
  func.func @transform_11(%arg0: i32) -> (i32, i32, i32) {
    %c0_i32 = arith.constant 0 : i32
    %c0_i32_0 = arith.constant 0 : i32
    %c0_i32_1 = arith.constant 0 : i32
    return %arg0, %c0_i32, %c0_i32_0 : i32, i32, i32
  }
  func.func @transform_12(%arg0: i32) -> (i32, i32, i32) {
    %c0_i32 = arith.constant 0 : i32
    %c0_i32_0 = arith.constant 0 : i32
    %c0_i32_1 = arith.constant 0 : i32
    return %arg0, %c0_i32, %c0_i32_0 : i32, i32, i32
  }
  func.func @transform_13(%arg0: i32) -> (i32, i32, i32) {
    %c0_i32 = arith.constant 0 : i32
    %c0_i32_0 = arith.constant 0 : i32
    %c0_i32_1 = arith.constant 0 : i32
    return %arg0, %c0_i32, %c0_i32_0 : i32, i32, i32
  }
  func.func @transform_14(%arg0: i32) -> (i32, i32) {
    %c0_i32 = arith.constant 0 : i32
    %c0_i32_0 = arith.constant 0 : i32
    %c0_i32_1 = arith.constant 0 : i32
    return %c0_i32, %c0_i32_0 : i32, i32
  }
  func.func @transform_15(%arg0: i32) -> (i32, i32) {
    %c0_i32 = arith.constant 0 : i32
    %c0_i32_0 = arith.constant 0 : i32
    %c0_i32_1 = arith.constant 0 : i32
    return %c0_i32, %c0_i32_0 : i32, i32
  }
  func.func @transform_16(%arg0: i32) -> (i32, i32) {
    %c0_i32 = arith.constant 0 : i32
    %c0_i32_0 = arith.constant 0 : i32
    %c0_i32_1 = arith.constant 0 : i32
    return %c0_i32, %c0_i32_0 : i32, i32
  }
}

</mosaic_0001>

<llo_original>
// kernel: esm_wrapper_forward.1
$region0: #{esm_wrapper_forward.1}
  #allocation0 [shape = 'u32[]', space=smem, size = 0x4, offset = 0x4, fixed_abs, tag = 'smem constant byte address 0x4 - core index']
  #allocation1 [shape = 'u32[144,128]{1,0:T(1,128)}', space=vmem, size = 0x12000, scoped, tag = 'internal scratch']
  #allocation2 [shape = 'f32[20,32]{1,0:T(8,128)}', space=vmem, size = 0x3000, scoped, tag = 'scratch operand']
  %s0 = inlined_call_operand.vmem [shape: f32[20,32], index: 0, kind: input, shape index: {}]
  %s1 = inlined_call_operand.vmem [shape: f32[20,20], index: 1, kind: input, shape index: {}]
  %s2 = inlined_call_operand.vmem [shape: f32[2,1,32], index: 2, kind: input, shape index: {}]
  %s3 = inlined_call_operand.vmem [shape: f32[2,1,32], index: 3, kind: input, shape index: {}]
  %s4 = inlined_call_operand.vmem [shape: f32[2,32,96], index: 4, kind: input, shape index: {}]
  %s5 = inlined_call_operand.vmem [shape: f32[2,1,96], index: 5, kind: input, shape index: {}]
  %s6 = inlined_call_operand.vmem [shape: f32[2,32,32], index: 6, kind: input, shape index: {}]
  %s7 = inlined_call_operand.vmem [shape: f32[2,1,32], index: 7, kind: input, shape index: {}]
  %s8 = inlined_call_operand.vmem [shape: f32[2,1,32], index: 8, kind: input, shape index: {}]
  %s9 = inlined_call_operand.vmem [shape: f32[2,1,32], index: 9, kind: input, shape index: {}]
  %s10 = inlined_call_operand.vmem [shape: f32[2,32,128], index: 10, kind: input, shape index: {}]
  %s11 = inlined_call_operand.vmem [shape: f32[2,1,128], index: 11, kind: input, shape index: {}]
  %s12 = inlined_call_operand.vmem [shape: f32[2,128,32], index: 12, kind: input, shape index: {}]
  %s13 = inlined_call_operand.vmem [shape: f32[2,1,32], index: 13, kind: input, shape index: {}]
  %s14 = inlined_call_operand.vmem [shape: f32[1,32], index: 14, kind: input, shape index: {}]
  %s15 = inlined_call_operand.vmem [shape: f32[1,32], index: 15, kind: input, shape index: {}]
  %s16 = inlined_call_operand.vmem [shape: f32[20,32], index: 16, kind: output, shape index: {}]
  %s17 = sld [smem:[#allocation0]]
  $region105: #{esm_wrapper_forward.1} parent=0
    _
  %s19 = ssub.s32 1, %s17
  %s20 = scalar_select 0, %s19, %s17
  loop: start=0, step=1, limit=4
  $region2: #{esm_wrapper_forward.1} parent=0 // loop_pre_header
    _
  $region3: #{esm_wrapper_forward.1} parent=0 // loop_header
    %s22 = sphi 0, %s26
    %p23 = scmp.ge.s32.totalorder %s22, 4
    %s30 = sphi 0, %s30
    %s32 = sphi 0, %s30
    %s33 = sphi 0, %s32
    %s47 = sphi 0, %s33
    %s51 = sphi 0, %s51
    %s53 = sphi 0, %s51
    %s54 = sphi 0, %s53
    %s68 = sphi 0, %s54
    %s74 = sphi 0, %s76
    %s77 = sphi 0, %s74
    %s78 = sphi 0, %s77
    %s94 = sphi 0, %s78
    %s100 = sphi 0, %s102
    %s103 = sphi 0, %s100
    %s104 = sphi 0, %s103
    %s120 = sphi 0, %s104
    %s126 = sphi 0, %s128
    %s129 = sphi 0, %s126
    %s130 = sphi 0, %s129
    %s146 = sphi 0, %s130
    %s152 = sphi 0, %s154
    %s155 = sphi 0, %s152
    %s156 = sphi 0, %s155
    %s172 = sphi 0, %s156
    %s178 = sphi 0, %s180
    %s181 = sphi 0, %s178
    %s182 = sphi 0, %s181
    %s198 = sphi 0, %s182
    %s204 = sphi 0, %s206
    %s207 = sphi 0, %s204
    %s208 = sphi 0, %s207
    %s224 = sphi 0, %s208
    %s230 = sphi 0, %s232
    %s233 = sphi 0, %s230
    %s234 = sphi 0, %s233
    %s250 = sphi 0, %s234
    %s256 = sphi 0, %s258
    %s259 = sphi 0, %s256
    %s260 = sphi 0, %s259
    %s276 = sphi 0, %s260
    %s282 = sphi 0, %s284
    %s285 = sphi 0, %s282
    %s286 = sphi 0, %s285
    %s302 = sphi 0, %s286
    %s308 = sphi 0, %s310
    %s311 = sphi 0, %s308
    %s312 = sphi 0, %s311
    %s328 = sphi 0, %s312
    %s334 = sphi 0, %s336
    %s337 = sphi 0, %s334
    %s338 = sphi 0, %s337
    %s354 = sphi 0, %s338
    %s360 = sphi 0, %s362
    %s363 = sphi 0, %s360
    %s364 = sphi 0, %s363
    %s380 = sphi 0, %s364
    %s384 = sphi 0, %s384
    %s386 = sphi 0, %s384
    %s387 = sphi 0, %s386
    %s401 = sphi 0, %s387
    %s405 = sphi 0, %s405
    %s407 = sphi 0, %s405
    %s408 = sphi 0, %s407
    %s422 = sphi 0, %s408
    %s426 = sphi 0, %s426
    %s428 = sphi 0, %s426
    %s429 = sphi 0, %s428
    %s443 = sphi 0, %s429
  $region4: #{esm_wrapper_forward.1} parent=0 // loop_header_branch
    %25 = sbr.rel (%p23) target = $region8
  $region5: #{esm_wrapper_forward.1} parent=0 // loop_body
    %s27 = ssub.s32 %s22, 1
    %s28 = ssub.s32 %s22, 2
    %s29 = sadd.s32 %s22, 1
    %s31 = sadd.s32 %s30, 1
    %p34 = scmp.eq.s32.totalorder %s22, 1
    %p35 = scmp.ne.s32.totalorder %s30, %s32
    %p36 = scmp.eq.s32.totalorder %s22, 0
    %p37 = por %p35, %p36
    %p38 = scmp.ne.s32.totalorder %s30, %s32
    %p39 = scmp.eq.s32.totalorder %s27, 1
    %p40 = por %p38, %p39
    %p41 = scmp.ne.s32.totalorder %s32, %s33
    %p42 = scmp.eq.s32.totalorder %s27, 0
    %p43 = por %p41, %p42
    %p44 = scmp.ne.s32.totalorder %s32, %s33
    %p45 = scmp.eq.s32.totalorder %s28, 1
    %p46 = por %p44, %p45
    %p48 = scmp.ne.s32.totalorder %s33, %s47
    %p49 = scmp.eq.s32.totalorder %s28, 0
    %p50 = por %p48, %p49
    %s52 = sadd.s32 %s51, 1
    %p55 = scmp.eq.s32.totalorder %s22, 1
    %p56 = scmp.ne.s32.totalorder %s51, %s53
    %p57 = scmp.eq.s32.totalorder %s22, 0
    %p58 = por %p56, %p57
    %p59 = scmp.ne.s32.totalorder %s51, %s53
    %p60 = scmp.eq.s32.totalorder %s27, 1
    %p61 = por %p59, %p60
    %p62 = scmp.ne.s32.totalorder %s53, %s54
    %p63 = scmp.eq.s32.totalorder %s27, 0
    %p64 = por %p62, %p63
    %p65 = scmp.ne.s32.totalorder %s53, %s54
    %p66 = scmp.eq.s32.totalorder %s28, 1
    %p67 = por %p65, %p66
    %p69 = scmp.ne.s32.totalorder %s54, %s68
    %p70 = scmp.eq.s32.totalorder %s28, 0
    %p71 = por %p69, %p70
    %s72 = ssub.s32 %s22, %s29
    %p73 = scmp.eq.s32.totalorder %s72, 0
    %s75 = sadd.s32 %s74, 1
    %s76 = scalar_select %p73, %s74, %s75
    %p79 = pneg %p73
    %p80 = scmp.eq.s32.totalorder %s22, 1
    %p81 = por %p79, %p80
    %p82 = scmp.ne.s32.totalorder %s74, %s77
    %p83 = scmp.eq.s32.totalorder %s22, 0
    %p84 = por %p82, %p83
    %p85 = scmp.ne.s32.totalorder %s74, %s77
    %p86 = scmp.eq.s32.totalorder %s27, 1
    %p87 = por %p85, %p86
    %p88 = scmp.ne.s32.totalorder %s77, %s78
    %p89 = scmp.eq.s32.totalorder %s27, 0
    %p90 = por %p88, %p89
    %p91 = scmp.ne.s32.totalorder %s77, %s78
    %p92 = scmp.eq.s32.totalorder %s28, 1
    %p93 = por %p91, %p92
    %p95 = scmp.ne.s32.totalorder %s78, %s94
    %p96 = scmp.eq.s32.totalorder %s28, 0
    %p97 = por %p95, %p96
    %s98 = ssub.s32 %s22, %s29
    %p99 = scmp.eq.s32.totalorder %s98, 0
    %s101 = sadd.s32 %s100, 1
    %s102 = scalar_select %p99, %s100, %s101
    %p105 = pneg %p99
    %p106 = scmp.eq.s32.totalorder %s22, 1
    %p107 = por %p105, %p106
    %p108 = scmp.ne.s32.totalorder %s100, %s103
    %p109 = scmp.eq.s32.totalorder %s22, 0
    %p110 = por %p108, %p109
    %p111 = scmp.ne.s32.totalorder %s100, %s103
    %p112 = scmp.eq.s32.totalorder %s27, 1
    %p113 = por %p111, %p112
    %p114 = scmp.ne.s32.totalorder %s103, %s104
    %p115 = scmp.eq.s32.totalorder %s27, 0
    %p116 = por %p114, %p115
    %p117 = scmp.ne.s32.totalorder %s103, %s104
    %p118 = scmp.eq.s32.totalorder %s28, 1
    %p119 = por %p117, %p118
    %p121 = scmp.ne.s32.totalorder %s104, %s120
    %p122 = scmp.eq.s32.totalorder %s28, 0
    %p123 = por %p121, %p122
    %s124 = ssub.s32 %s22, %s29
    %p125 = scmp.eq.s32.totalorder %s124, 0
    %s127 = sadd.s32 %s126, 1
    %s128 = scalar_select %p125, %s126, %s127
    %p131 = pneg %p125
    %p132 = scmp.eq.s32.totalorder %s22, 1
    %p133 = por %p131, %p132
    %p134 = scmp.ne.s32.totalorder %s126, %s129
    %p135 = scmp.eq.s32.totalorder %s22, 0
    %p136 = por %p134, %p135
    %p137 = scmp.ne.s32.totalorder %s126, %s129
    %p138 = scmp.eq.s32.totalorder %s27, 1
    %p139 = por %p137, %p138
    %p140 = scmp.ne.s32.totalorder %s129, %s130
    %p141 = scmp.eq.s32.totalorder %s27, 0
    %p142 = por %p140, %p141
    %p143 = scmp.ne.s32.totalorder %s129, %s130
    %p144 = scmp.eq.s32.totalorder %s28, 1
    %p145 = por %p143, %p144
    %p147 = scmp.ne.s32.totalorder %s130, %s146
    %p148 = scmp.eq.s32.totalorder %s28, 0
    %p149 = por %p147, %p148
    %s150 = ssub.s32 %s22, %s29
    %p151 = scmp.eq.s32.totalorder %s150, 0
    %s153 = sadd.s32 %s152, 1
    %s154 = scalar_select %p151, %s152, %s153
    %p157 = pneg %p151
    %p158 = scmp.eq.s32.totalorder %s22, 1
    %p159 = por %p157, %p158
    %p160 = scmp.ne.s32.totalorder %s152, %s155
    %p161 = scmp.eq.s32.totalorder %s22, 0
    %p162 = por %p160, %p161
    %p163 = scmp.ne.s32.totalorder %s152, %s155
    %p164 = scmp.eq.s32.totalorder %s27, 1
    %p165 = por %p163, %p164
    %p166 = scmp.ne.s32.totalorder %s155, %s156
    %p167 = scmp.eq.s32.totalorder %s27, 0
    %p168 = por %p166, %p167
    %p169 = scmp.ne.s32.totalorder %s155, %s156
    %p170 = scmp.eq.s32.totalorder %s28, 1
    %p171 = por %p169, %p170
    %p173 = scmp.ne.s32.totalorder %s156, %s172
    %p174 = scmp.eq.s32.totalorder %s28, 0
    %p175 = por %p173, %p174
    %s176 = ssub.s32 %s22, %s29
    %p177 = scmp.eq.s32.totalorder %s176, 0
    %s179 = sadd.s32 %s178, 1
    %s180 = scalar_select %p177, %s178, %s179
    %p183 = pneg %p177
    %p184 = scmp.eq.s32.totalorder %s22, 1
    %p185 = por %p183, %p184
    %p186 = scmp.ne.s32.totalorder %s178, %s181
    %p187 = scmp.eq.s32.totalorder %s22, 0
    %p188 = por %p186, %p187
    %p189 = scmp.ne.s32.totalorder %s178, %s181
    %p190 = scmp.eq.s32.totalorder %s27, 1
    %p191 = por %p189, %p190
    %p192 = scmp.ne.s32.totalorder %s181, %s182
    %p193 = scmp.eq.s32.totalorder %s27, 0
    %p194 = por %p192, %p193
    %p195 = scmp.ne.s32.totalorder %s181, %s182
    %p196 = scmp.eq.s32.totalorder %s28, 1
    %p197 = por %p195, %p196
    %p199 = scmp.ne.s32.totalorder %s182, %s198
    %p200 = scmp.eq.s32.totalorder %s28, 0
    %p201 = por %p199, %p200
    %s202 = ssub.s32 %s22, %s29
    %p203 = scmp.eq.s32.totalorder %s202, 0
    %s205 = sadd.s32 %s204, 1
    %s206 = scalar_select %p203, %s204, %s205
    %p209 = pneg %p203
    %p210 = scmp.eq.s32.totalorder %s22, 1
    %p211 = por %p209, %p210
    %p212 = scmp.ne.s32.totalorder %s204, %s207
    %p213 = scmp.eq.s32.totalorder %s22, 0
    %p214 = por %p212, %p213
    %p215 = scmp.ne.s32.totalorder %s204, %s207
    %p216 = scmp.eq.s32.totalorder %s27, 1
    %p217 = por %p215, %p216
    %p218 = scmp.ne.s32.totalorder %s207, %s208
    %p219 = scmp.eq.s32.totalorder %s27, 0
    %p220 = por %p218, %p219
    %p221 = scmp.ne.s32.totalorder %s207, %s208
    %p222 = scmp.eq.s32.totalorder %s28, 1
    %p223 = por %p221, %p222
    %p225 = scmp.ne.s32.totalorder %s208, %s224
    %p226 = scmp.eq.s32.totalorder %s28, 0
    %p227 = por %p225, %p226
    %s228 = ssub.s32 %s22, %s29
    %p229 = scmp.eq.s32.totalorder %s228, 0
    %s231 = sadd.s32 %s230, 1
    %s232 = scalar_select %p229, %s230, %s231
    %p235 = pneg %p229
    %p236 = scmp.eq.s32.totalorder %s22, 1
    %p237 = por %p235, %p236
    %p238 = scmp.ne.s32.totalorder %s230, %s233
    %p239 = scmp.eq.s32.totalorder %s22, 0
    %p240 = por %p238, %p239
    %p241 = scmp.ne.s32.totalorder %s230, %s233
    %p242 = scmp.eq.s32.totalorder %s27, 1
    %p243 = por %p241, %p242
    %p244 = scmp.ne.s32.totalorder %s233, %s234
    %p245 = scmp.eq.s32.totalorder %s27, 0
    %p246 = por %p244, %p245
    %p247 = scmp.ne.s32.totalorder %s233, %s234
    %p248 = scmp.eq.s32.totalorder %s28, 1
    %p249 = por %p247, %p248
    %p251 = scmp.ne.s32.totalorder %s234, %s250
    %p252 = scmp.eq.s32.totalorder %s28, 0
    %p253 = por %p251, %p252
    %s254 = ssub.s32 %s22, %s29
    %p255 = scmp.eq.s32.totalorder %s254, 0
    %s257 = sadd.s32 %s256, 1
    %s258 = scalar_select %p255, %s256, %s257
    %p261 = pneg %p255
    %p262 = scmp.eq.s32.totalorder %s22, 1
    %p263 = por %p261, %p262
    %p264 = scmp.ne.s32.totalorder %s256, %s259
    %p265 = scmp.eq.s32.totalorder %s22, 0
    %p266 = por %p264, %p265
    %p267 = scmp.ne.s32.totalorder %s256, %s259
    %p268 = scmp.eq.s32.totalorder %s27, 1
    %p269 = por %p267, %p268
    %p270 = scmp.ne.s32.totalorder %s259, %s260
    %p271 = scmp.eq.s32.totalorder %s27, 0
    %p272 = por %p270, %p271
    %p273 = scmp.ne.s32.totalorder %s259, %s260
    %p274 = scmp.eq.s32.totalorder %s28, 1
    %p275 = por %p273, %p274
    %p277 = scmp.ne.s32.totalorder %s260, %s276
    %p278 = scmp.eq.s32.totalorder %s28, 0
    %p279 = por %p277, %p278
    %s280 = ssub.s32 %s22, %s29
    %p281 = scmp.eq.s32.totalorder %s280, 0
    %s283 = sadd.s32 %s282, 1
    %s284 = scalar_select %p281, %s282, %s283
    %p287 = pneg %p281
    %p288 = scmp.eq.s32.totalorder %s22, 1
    %p289 = por %p287, %p288
    %p290 = scmp.ne.s32.totalorder %s282, %s285
    %p291 = scmp.eq.s32.totalorder %s22, 0
    %p292 = por %p290, %p291
    %p293 = scmp.ne.s32.totalorder %s282, %s285
    %p294 = scmp.eq.s32.totalorder %s27, 1
    %p295 = por %p293, %p294
    %p296 = scmp.ne.s32.totalorder %s285, %s286
    %p297 = scmp.eq.s32.totalorder %s27, 0
    %p298 = por %p296, %p297
    %p299 = scmp.ne.s32.totalorder %s285, %s286
    %p300 = scmp.eq.s32.totalorder %s28, 1
    %p301 = por %p299, %p300
    %p303 = scmp.ne.s32.totalorder %s286, %s302
    %p304 = scmp.eq.s32.totalorder %s28, 0
    %p305 = por %p303, %p304
    %s306 = ssub.s32 %s22, %s29
    %p307 = scmp.eq.s32.totalorder %s306, 0
    %s309 = sadd.s32 %s308, 1
    %s310 = scalar_select %p307, %s308, %s309
    %p313 = pneg %p307
    %p314 = scmp.eq.s32.totalorder %s22, 1
    %p315 = por %p313, %p314
    %p316 = scmp.ne.s32.totalorder %s308, %s311
    %p317 = scmp.eq.s32.totalorder %s22, 0
    %p318 = por %p316, %p317
    %p319 = scmp.ne.s32.totalorder %s308, %s311
    %p320 = scmp.eq.s32.totalorder %s27, 1
    %p321 = por %p319, %p320
    %p322 = scmp.ne.s32.totalorder %s311, %s312
    %p323 = scmp.eq.s32.totalorder %s27, 0
    %p324 = por %p322, %p323
    %p325 = scmp.ne.s32.totalorder %s311, %s312
    %p326 = scmp.eq.s32.totalorder %s28, 1
    %p327 = por %p325, %p326
    %p329 = scmp.ne.s32.totalorder %s312, %s328
    %p330 = scmp.eq.s32.totalorder %s28, 0
    %p331 = por %p329, %p330
    %s332 = ssub.s32 %s22, %s29
    %p333 = scmp.eq.s32.totalorder %s332, 0
    %s335 = sadd.s32 %s334, 1
    %s336 = scalar_select %p333, %s334, %s335
    %p339 = pneg %p333
    %p340 = scmp.eq.s32.totalorder %s22, 1
    %p341 = por %p339, %p340
    %p342 = scmp.ne.s32.totalorder %s334, %s337
    %p343 = scmp.eq.s32.totalorder %s22, 0
    %p344 = por %p342, %p343
    %p345 = scmp.ne.s32.totalorder %s334, %s337
    %p346 = scmp.eq.s32.totalorder %s27, 1
    %p347 = por %p345, %p346
    %p348 = scmp.ne.s32.totalorder %s337, %s338
    %p349 = scmp.eq.s32.totalorder %s27, 0
    %p350 = por %p348, %p349
    %p351 = scmp.ne.s32.totalorder %s337, %s338
    %p352 = scmp.eq.s32.totalorder %s28, 1
    %p353 = por %p351, %p352
    %p355 = scmp.ne.s32.totalorder %s338, %s354
    %p356 = scmp.eq.s32.totalorder %s28, 0
    %p357 = por %p355, %p356
    %s358 = ssub.s32 %s22, %s29
    %p359 = scmp.eq.s32.totalorder %s358, 0
    %s361 = sadd.s32 %s360, 1
    %s362 = scalar_select %p359, %s360, %s361
    %p365 = pneg %p359
    %p366 = scmp.eq.s32.totalorder %s22, 1
    %p367 = por %p365, %p366
    %p368 = scmp.ne.s32.totalorder %s360, %s363
    %p369 = scmp.eq.s32.totalorder %s22, 0
    %p370 = por %p368, %p369
    %p371 = scmp.ne.s32.totalorder %s360, %s363
    %p372 = scmp.eq.s32.totalorder %s27, 1
    %p373 = por %p371, %p372
    %p374 = scmp.ne.s32.totalorder %s363, %s364
    %p375 = scmp.eq.s32.totalorder %s27, 0
    %p376 = por %p374, %p375
    %p377 = scmp.ne.s32.totalorder %s363, %s364
    %p378 = scmp.eq.s32.totalorder %s28, 1
    %p379 = por %p377, %p378
    %p381 = scmp.ne.s32.totalorder %s364, %s380
    %p382 = scmp.eq.s32.totalorder %s28, 0
    %p383 = por %p381, %p382
    %s385 = sadd.s32 %s384, 1
    %p388 = scmp.eq.s32.totalorder %s22, 1
    %p389 = scmp.ne.s32.totalorder %s384, %s386
    %p390 = scmp.eq.s32.totalorder %s22, 0
    %p391 = por %p389, %p390
    %p392 = scmp.ne.s32.totalorder %s384, %s386
    %p393 = scmp.eq.s32.totalorder %s27, 1
    %p394 = por %p392, %p393
    %p395 = scmp.ne.s32.totalorder %s386, %s387
    %p396 = scmp.eq.s32.totalorder %s27, 0
    %p397 = por %p395, %p396
    %p398 = scmp.ne.s32.totalorder %s386, %s387
    %p399 = scmp.eq.s32.totalorder %s28, 1
    %p400 = por %p398, %p399
    %p402 = scmp.ne.s32.totalorder %s387, %s401
    %p403 = scmp.eq.s32.totalorder %s28, 0
    %p404 = por %p402, %p403
    %s406 = sadd.s32 %s405, 1
    %p409 = scmp.eq.s32.totalorder %s22, 1
    %p410 = scmp.ne.s32.totalorder %s405, %s407
    %p411 = scmp.eq.s32.totalorder %s22, 0
    %p412 = por %p410, %p411
    %p413 = scmp.ne.s32.totalorder %s405, %s407
    %p414 = scmp.eq.s32.totalorder %s27, 1
    %p415 = por %p413, %p414
    %p416 = scmp.ne.s32.totalorder %s407, %s408
    %p417 = scmp.eq.s32.totalorder %s27, 0
    %p418 = por %p416, %p417
    %p419 = scmp.ne.s32.totalorder %s407, %s408
    %p420 = scmp.eq.s32.totalorder %s28, 1
    %p421 = por %p419, %p420
    %p423 = scmp.ne.s32.totalorder %s408, %s422
    %p424 = scmp.eq.s32.totalorder %s28, 0
    %p425 = por %p423, %p424
    %s427 = sadd.s32 %s426, 1
    %p430 = scmp.eq.s32.totalorder %s22, 1
    %p431 = scmp.ne.s32.totalorder %s426, %s428
    %p432 = scmp.eq.s32.totalorder %s22, 0
    %p433 = por %p431, %p432
    %p434 = scmp.ne.s32.totalorder %s426, %s428
    %p435 = scmp.eq.s32.totalorder %s27, 1
    %p436 = por %p434, %p435
    %p437 = scmp.ne.s32.totalorder %s428, %s429
    %p438 = scmp.eq.s32.totalorder %s27, 0
    %p439 = por %p437, %p438
    %p440 = scmp.ne.s32.totalorder %s428, %s429
    %p441 = scmp.eq.s32.totalorder %s28, 1
    %p442 = por %p440, %p441
    %p444 = scmp.ne.s32.totalorder %s429, %s443
    %p445 = scmp.eq.s32.totalorder %s28, 0
    %p446 = por %p444, %p445
    %p447 = scmp.le.s32.totalorder 1, %s22
    %p448 = scmp.lt.s32.totalorder %s22, 3
    %p449 = pnand %p447, %p448
    %p450 = pneg %p449
    // Predicated region
    $region9: #{esm_wrapper_forward.1} parent=5 // pred_check
      _
    $region10: #{esm_wrapper_forward.1} parent=5 // pred_check_branch
      %452 = sbr.rel (%p449) target = $region12
    $region11: #{esm_wrapper_forward.1} parent=5 // pred_region
      %s453 = ssub.s32 %s22, 1
      // Predicated region
      $region13: #{esm_wrapper_forward.1} parent=11 // pred_check
        %p454 = pneg %p43
      $region14: #{esm_wrapper_forward.1} parent=11 // pred_check_branch
        %456 = sbr.rel (%p454) target = $region16
      $region15: #{esm_wrapper_forward.1} parent=11 // pred_region
        _
      $region16: #{esm_wrapper_forward.1} parent=11 // pred_fallthru
        _
      // Predicated region
      $region17: #{esm_wrapper_forward.1} parent=11 // pred_check
        %p457 = pneg %p64
      $region18: #{esm_wrapper_forward.1} parent=11 // pred_check_branch
        %459 = sbr.rel (%p457) target = $region20
      $region19: #{esm_wrapper_forward.1} parent=11 // pred_region
        _
      $region20: #{esm_wrapper_forward.1} parent=11 // pred_fallthru
        _
      // Predicated region
      $region21: #{esm_wrapper_forward.1} parent=11 // pred_check
        %p460 = pneg %p397
      $region22: #{esm_wrapper_forward.1} parent=11 // pred_check_branch
        %462 = sbr.rel (%p460) target = $region24
      $region23: #{esm_wrapper_forward.1} parent=11 // pred_region
        _
      $region24: #{esm_wrapper_forward.1} parent=11 // pred_fallthru
        _
      // Predicated region
      $region25: #{esm_wrapper_forward.1} parent=11 // pred_check
        %p463 = pneg %p418
      $region26: #{esm_wrapper_forward.1} parent=11 // pred_check_branch
        %465 = sbr.rel (%p463) target = $region28
      $region27: #{esm_wrapper_forward.1} parent=11 // pred_region
        _
      $region28: #{esm_wrapper_forward.1} parent=11 // pred_fallthru
        _
    $region12: #{esm_wrapper_forward.1} parent=5 // pred_fallthru
      _
    %p466 = scmp.lt.s32.totalorder %s22, 2
    // Predicated region
    $region29: #{esm_wrapper_forward.1} parent=5 // pred_check
      %p467 = pneg %p466
    $region30: #{esm_wrapper_forward.1} parent=5 // pred_check_branch
      %469 = sbr.rel (%p467) target = $region32
    $region31: #{esm_wrapper_forward.1} parent=5 // pred_region
      // Predicated region
      $region33: #{esm_wrapper_forward.1} parent=31 // pred_check
        %p470 = pneg %p84
      $region34: #{esm_wrapper_forward.1} parent=31 // pred_check_branch
        %472 = sbr.rel (%p470) target = $region36
      $region35: #{esm_wrapper_forward.1} parent=31 // pred_region
        %p473 = scmp.lt.s32.totalorder %s22, 1
        %s474 = scalar_select %p473, %s22, 1
        %s475 = scalar_lea.vmem %s2, %s474
      $region36: #{esm_wrapper_forward.1} parent=31 // pred_fallthru
        _
      // Predicated region
      $region37: #{esm_wrapper_forward.1} parent=31 // pred_check
        %p476 = pneg %p110
      $region38: #{esm_wrapper_forward.1} parent=31 // pred_check_branch
        %478 = sbr.rel (%p476) target = $region40
      $region39: #{esm_wrapper_forward.1} parent=31 // pred_region
        %p479 = scmp.lt.s32.totalorder %s22, 1
        %s480 = scalar_select %p479, %s22, 1
        %s481 = scalar_lea.vmem %s3, %s480
      $region40: #{esm_wrapper_forward.1} parent=31 // pred_fallthru
        _
      // Predicated region
      $region41: #{esm_wrapper_forward.1} parent=31 // pred_check
        %p482 = pneg %p136
      $region42: #{esm_wrapper_forward.1} parent=31 // pred_check_branch
        %484 = sbr.rel (%p482) target = $region44
      $region43: #{esm_wrapper_forward.1} parent=31 // pred_region
        %p485 = scmp.lt.s32.totalorder %s22, 1
        %s486 = scalar_select %p485, %s22, 1
        %s487 = smul.addr %s486, 4
        %s488 = smul.addr %s487, 8
        %s489 = scalar_lea.vmem %s4, %s488
      $region44: #{esm_wrapper_forward.1} parent=31 // pred_fallthru
        _
      // Predicated region
      $region45: #{esm_wrapper_forward.1} parent=31 // pred_check
        %p490 = pneg %p162
      $region46: #{esm_wrapper_forward.1} parent=31 // pred_check_branch
        %492 = sbr.rel (%p490) target = $region48
      $region47: #{esm_wrapper_forward.1} parent=31 // pred_region
        %p493 = scmp.lt.s32.totalorder %s22, 1
        %s494 = scalar_select %p493, %s22, 1
        %s495 = scalar_lea.vmem %s5, %s494
      $region48: #{esm_wrapper_forward.1} parent=31 // pred_fallthru
        _
      // Predicated region
      $region49: #{esm_wrapper_forward.1} parent=31 // pred_check
        %p496 = pneg %p188
      $region50: #{esm_wrapper_forward.1} parent=31 // pred_check_branch
        %498 = sbr.rel (%p496) target = $region52
      $region51: #{esm_wrapper_forward.1} parent=31 // pred_region
        %p499 = scmp.lt.s32.totalorder %s22, 1
        %s500 = scalar_select %p499, %s22, 1
        %s501 = smul.addr %s500, 4
        %s502 = smul.addr %s501, 8
        %s503 = scalar_lea.vmem %s6, %s502
      $region52: #{esm_wrapper_forward.1} parent=31 // pred_fallthru
        _
      // Predicated region
      $region53: #{esm_wrapper_forward.1} parent=31 // pred_check
        %p504 = pneg %p214
      $region54: #{esm_wrapper_forward.1} parent=31 // pred_check_branch
        %506 = sbr.rel (%p504) target = $region56
      $region55: #{esm_wrapper_forward.1} parent=31 // pred_region
        %p507 = scmp.lt.s32.totalorder %s22, 1
        %s508 = scalar_select %p507, %s22, 1
        %s509 = scalar_lea.vmem %s7, %s508
      $region56: #{esm_wrapper_forward.1} parent=31 // pred_fallthru
        _
      // Predicated region
      $region57: #{esm_wrapper_forward.1} parent=31 // pred_check
        %p510 = pneg %p240
      $region58: #{esm_wrapper_forward.1} parent=31 // pred_check_branch
        %512 = sbr.rel (%p510) target = $region60
      $region59: #{esm_wrapper_forward.1} parent=31 // pred_region
        %p513 = scmp.lt.s32.totalorder %s22, 1
        %s514 = scalar_select %p513, %s22, 1
        %s515 = scalar_lea.vmem %s8, %s514
      $region60: #{esm_wrapper_forward.1} parent=31 // pred_fallthru
        _
      // Predicated region
      $region61: #{esm_wrapper_forward.1} parent=31 // pred_check
        %p516 = pneg %p266
      $region62: #{esm_wrapper_forward.1} parent=31 // pred_check_branch
        %518 = sbr.rel (%p516) target = $region64
      $region63: #{esm_wrapper_forward.1} parent=31 // pred_region
        %p519 = scmp.lt.s32.totalorder %s22, 1
        %s520 = scalar_select %p519, %s22, 1
        %s521 = scalar_lea.vmem %s9, %s520
      $region64: #{esm_wrapper_forward.1} parent=31 // pred_fallthru
        _
      // Predicated region
      $region65: #{esm_wrapper_forward.1} parent=31 // pred_check
        %p522 = pneg %p292
      $region66: #{esm_wrapper_forward.1} parent=31 // pred_check_branch
        %524 = sbr.rel (%p522) target = $region68
      $region67: #{esm_wrapper_forward.1} parent=31 // pred_region
        %p525 = scmp.lt.s32.totalorder %s22, 1
        %s526 = scalar_select %p525, %s22, 1
        %s527 = smul.addr %s526, 4
        %s528 = smul.addr %s527, 8
        %s529 = scalar_lea.vmem %s10, %s528
      $region68: #{esm_wrapper_forward.1} parent=31 // pred_fallthru
        _
      // Predicated region
      $region69: #{esm_wrapper_forward.1} parent=31 // pred_check
        %p530 = pneg %p318
      $region70: #{esm_wrapper_forward.1} parent=31 // pred_check_branch
        %532 = sbr.rel (%p530) target = $region72
      $region71: #{esm_wrapper_forward.1} parent=31 // pred_region
        %p533 = scmp.lt.s32.totalorder %s22, 1
        %s534 = scalar_select %p533, %s22, 1
        %s535 = scalar_lea.vmem %s11, %s534
      $region72: #{esm_wrapper_forward.1} parent=31 // pred_fallthru
        _
      // Predicated region
      $region73: #{esm_wrapper_forward.1} parent=31 // pred_check
        %p536 = pneg %p344
      $region74: #{esm_wrapper_forward.1} parent=31 // pred_check_branch
        %538 = sbr.rel (%p536) target = $region76
      $region75: #{esm_wrapper_forward.1} parent=31 // pred_region
        %p539 = scmp.lt.s32.totalorder %s22, 1
        %s540 = scalar_select %p539, %s22, 1
        %s541 = smul.addr %s540, 16
        %s542 = smul.addr %s541, 8
        %s543 = scalar_lea.vmem %s12, %s542
      $region76: #{esm_wrapper_forward.1} parent=31 // pred_fallthru
        _
      // Predicated region
      $region77: #{esm_wrapper_forward.1} parent=31 // pred_check
        %p544 = pneg %p370
      $region78: #{esm_wrapper_forward.1} parent=31 // pred_check_branch
        %546 = sbr.rel (%p544) target = $region80
      $region79: #{esm_wrapper_forward.1} parent=31 // pred_region
        %p547 = scmp.lt.s32.totalorder %s22, 1
        %s548 = scalar_select %p547, %s22, 1
        %s549 = scalar_lea.vmem %s13, %s548
      $region80: #{esm_wrapper_forward.1} parent=31 // pred_fallthru
        _
    $region32: #{esm_wrapper_forward.1} parent=5 // pred_fallthru
      _
    %p550 = scmp.le.s32.totalorder 1, %s22
    %p551 = scmp.lt.s32.totalorder %s22, 3
    %p552 = pnand %p550, %p551
    %p553 = pneg %p552
    // Predicated region
    $region81: #{esm_wrapper_forward.1} parent=5 // pred_check
      _
    $region82: #{esm_wrapper_forward.1} parent=5 // pred_check_branch
      %555 = sbr.rel (%p552) target = $region84
    $region83: #{esm_wrapper_forward.1} parent=5 // pred_region
      %s556 = ssub.s32 %s22, 1
      %p557 = pneg %p43
      %p558 = pneg %p40
      %p559 = pneg %p64
      %p560 = pneg %p61
      %p561 = scmp.lt.s32.totalorder %s27, 1
      %s562 = scalar_select %p561, %s27, 1
      %s563 = scalar_lea.vmem %s2, %s562
      %p564 = pneg %p90
      %p565 = pneg %p87
      %p566 = scmp.lt.s32.totalorder %s27, 1
      %s567 = scalar_select %p566, %s27, 1
      %s568 = scalar_lea.vmem %s3, %s567
      %p569 = pneg %p116
      %p570 = pneg %p113
      %p571 = scmp.lt.s32.totalorder %s27, 1
      %s572 = scalar_select %p571, %s27, 1
      %s573 = smul.addr %s572, 4
      %s574 = smul.addr %s573, 8
      %s575 = scalar_lea.vmem %s4, %s574
      %p576 = pneg %p142
      %p577 = pneg %p139
      %p578 = scmp.lt.s32.totalorder %s27, 1
      %s579 = scalar_select %p578, %s27, 1
      %s580 = scalar_lea.vmem %s5, %s579
      %p581 = pneg %p168
      %p582 = pneg %p165
      %p583 = scmp.lt.s32.totalorder %s27, 1
      %s584 = scalar_select %p583, %s27, 1
      %s585 = smul.addr %s584, 4
      %s586 = smul.addr %s585, 8
      %s587 = scalar_lea.vmem %s6, %s586
      %p588 = pneg %p194
      %p589 = pneg %p191
      %p590 = scmp.lt.s32.totalorder %s27, 1
      %s591 = scalar_select %p590, %s27, 1
      %s592 = scalar_lea.vmem %s7, %s591
      %p593 = pneg %p220
      %p594 = pneg %p217
      %p595 = scmp.lt.s32.totalorder %s27, 1
      %s596 = scalar_select %p595, %s27, 1
      %s597 = scalar_lea.vmem %s8, %s596
      %p598 = pneg %p246
      %p599 = pneg %p243
      %p600 = scmp.lt.s32.totalorder %s27, 1
      %s601 = scalar_select %p600, %s27, 1
      %s602 = scalar_lea.vmem %s9, %s601
      %p603 = pneg %p272
      %p604 = pneg %p269
      %p605 = scmp.lt.s32.totalorder %s27, 1
      %s606 = scalar_select %p605, %s27, 1
      %s607 = smul.addr %s606, 4
      %s608 = smul.addr %s607, 8
      %s609 = scalar_lea.vmem %s10, %s608
      %p610 = pneg %p298
      %p611 = pneg %p295
      %p612 = scmp.lt.s32.totalorder %s27, 1
      %s613 = scalar_select %p612, %s27, 1
      %s614 = scalar_lea.vmem %s11, %s613
      %p615 = pneg %p324
      %p616 = pneg %p321
      %p617 = scmp.lt.s32.totalorder %s27, 1
      %s618 = scalar_select %p617, %s27, 1
      %s619 = smul.addr %s618, 16
      %s620 = smul.addr %s619, 8
      %s621 = scalar_lea.vmem %s12, %s620
      %p622 = pneg %p350
      %p623 = pneg %p347
      %p624 = scmp.lt.s32.totalorder %s27, 1
      %s625 = scalar_select %p624, %s27, 1
      %s626 = scalar_lea.vmem %s13, %s625
      %p627 = pneg %p376
      %p628 = pneg %p373
      %p629 = pneg %p397
      %p630 = pneg %p394
      %p631 = pneg %p418
      %p632 = pneg %p415
      %p633 = pneg %p439
      %p634 = pneg %p436
      %p635 = scmp.lt.s32.totalorder %s27, 1
      %s636 = scalar_select %p635, %s27, 1
      %s637 = scalar_lea.vmem %s2, %s636
      %p638 = scmp.lt.s32.totalorder %s27, 1
      %s639 = scalar_select %p638, %s27, 1
      %s640 = scalar_lea.vmem %s3, %s639
      %p641 = scmp.lt.s32.totalorder %s27, 1
      %s642 = scalar_select %p641, %s27, 1
      %s643 = smul.addr %s642, 4
      %s644 = smul.addr %s643, 8
      %s645 = scalar_lea.vmem %s4, %s644
      %p646 = scmp.lt.s32.totalorder %s27, 1
      %s647 = scalar_select %p646, %s27, 1
      %s648 = scalar_lea.vmem %s5, %s647
      %p649 = scmp.lt.s32.totalorder %s27, 1
      %s650 = scalar_select %p649, %s27, 1
      %s651 = smul.addr %s650, 4
      %s652 = smul.addr %s651, 8
      %s653 = scalar_lea.vmem %s6, %s652
      %p654 = scmp.lt.s32.totalorder %s27, 1
      %s655 = scalar_select %p654, %s27, 1
      %s656 = scalar_lea.vmem %s7, %s655
      %p657 = scmp.lt.s32.totalorder %s27, 1
      %s658 = scalar_select %p657, %s27, 1
      %s659 = scalar_lea.vmem %s8, %s658
      %p660 = scmp.lt.s32.totalorder %s27, 1
      %s661 = scalar_select %p660, %s27, 1
      %s662 = scalar_lea.vmem %s9, %s661
      %p663 = scmp.lt.s32.totalorder %s27, 1
      %s664 = scalar_select %p663, %s27, 1
      %s665 = smul.addr %s664, 4
      %s666 = smul.addr %s665, 8
      %s667 = scalar_lea.vmem %s10, %s666
      %p668 = scmp.lt.s32.totalorder %s27, 1
      %s669 = scalar_select %p668, %s27, 1
      %s670 = scalar_lea.vmem %s11, %s669
      %p671 = scmp.lt.s32.totalorder %s27, 1
      %s672 = scalar_select %p671, %s27, 1
      %s673 = smul.addr %s672, 16
      %s674 = smul.addr %s673, 8
      %s675 = scalar_lea.vmem %s12, %s674
      %p676 = scmp.lt.s32.totalorder %s27, 1
      %s677 = scalar_select %p676, %s27, 1
      %s678 = scalar_lea.vmem %s13, %s677
      %p679 = scmp.eq.s32.totalorder %s27, 0
      // Predicated region
      $region85: #{esm_wrapper_forward.1} parent=83 // pred_check
        %p680 = pneg %p679
      $region86: #{esm_wrapper_forward.1} parent=83 // pred_check_branch
        %682 = sbr.rel (%p680) target = $region88
      $region87: #{esm_wrapper_forward.1} parent=83 // pred_region
        %v683 = vld [vmem:[%s0] sm:$0xff]
        %v684 = vld [vmem:[%s0 + $0x8] sm:$0xff]
        %v685 = vld [vmem:[%s0 + $0x10] sm:$0xf]
        %vm686 = vcmask 261120
        %687 = vst.msk [vmem:[#allocation2] sm:$0xff] %vm686, %v683
        %688 = vst.msk [vmem:[#allocation2 + $0x8] sm:$0xff] %vm686, %v684
        %vm689 = vcmask 257024
        %690 = vst.msk [vmem:[#allocation2 + $0x10] sm:$0xf] %vm689, %v685
      $region88: #{esm_wrapper_forward.1} parent=83 // pred_fallthru
        _
      %v691 = vld [vmem:[#allocation2] sm:$0xff]
      %v692 = vld [vmem:[#allocation2 + $0x8] sm:$0xff]
      %v693 = vld [vmem:[#allocation2 + $0x10] sm:$0xf]
      %v694 = vld [vmem:[%s1] sm:$0xff]
      %v695 = vld [vmem:[%s1 + $0x8] sm:$0xff]
      %v696 = vld [vmem:[%s1 + $0x10] sm:$0xf]
      %v697 = vld [vmem:[%s637] sm:$0x1]
      %v698 = vld [vmem:[%s640] sm:$0x1]
      %vm699 = vcmask 261120
      %v700 = vsel %vm699, %v691, 0.0
      %701 = vadd.xlane.f32.xlu0 %v700
      %v702 = vpop.xlane.xlu0 %701
      %v703 = vsel %vm699, %v692, 0.0
      %704 = vadd.xlane.f32.xlu0 %v703
      %v705 = vpop.xlane.xlu0 %704
      %vm706 = vcmask 257024
      %v707 = vsel %vm706, %v693, 0.0
      %708 = vadd.xlane.f32.xlu0 %v707
      %v709 = vpop.xlane.xlu0 %708
      %v710 = vrcp.pop 32.0
      %v711 = vmul.f32 %v702, %v710
      %v712 = vmul.f32 %v705, %v710
      %v713 = vmul.f32 %v709, %v710
      %v714 = vsub.f32 %v691, %v711
      %v715 = vsub.f32 %v692, %v712
      %v716 = vsub.f32 %v693, %v713
      %v717 = vmul.f32 %v714, %v714
      %v718 = vmul.f32 %v715, %v715
      %v719 = vmul.f32 %v716, %v716
      %v720 = vsel %vm699, %v717, 0.0
      %721 = vadd.xlane.f32.xlu0 %v720
      %v722 = vpop.xlane.xlu0 %721
      %v723 = vsel %vm699, %v718, 0.0
      %724 = vadd.xlane.f32.xlu0 %v723
      %v725 = vpop.xlane.xlu0 %724
      %v726 = vsel %vm706, %v719, 0.0
      %727 = vadd.xlane.f32.xlu0 %v726
      %v728 = vpop.xlane.xlu0 %727
      %v729 = vmul.f32 %v722, %v710
      %v730 = vmul.f32 %v725, %v710
      %v731 = vmul.f32 %v728, %v710
      %v732 = vadd.f32 %v729, 1e-05
      %v733 = vadd.f32 %v730, 1e-05
      %v734 = vadd.f32 %v731, 1e-05
      %v735 = vrsqrt.pop %v732
      %v736 = vrsqrt.pop %v733
      %v737 = vrsqrt.pop %v734
      %v738 = vmul.f32 %v714, %v735
      %v739 = vmul.f32 %v715, %v736
      %v740 = vmul.f32 %v716, %v737
      %v742 = vlaneseq
      %v743 = vshrl.u32 %v742, 7
      %v744 = vsub.s32 0, %v743
      %v745 = vrot.slane %v697, %v744
      %v747 = vmul.f32 %v738, %v745
      %v748 = vmul.f32 %v739, %v745
      %v749 = vmul.f32 %v740, %v745
      %v751 = vlaneseq
      %v752 = vshrl.u32 %v751, 7
      %v753 = vsub.s32 0, %v752
      %v754 = vrot.slane %v698, %v753
      %v756 = vadd.f32 %v747, %v754
      %v757 = vadd.f32 %v748, %v754
      %v758 = vadd.f32 %v749, %v754
      %v759 = vld [vmem:[%s645] sm:$0xff]
      %v760 = vld [vmem:[%s645 + $0x8] sm:$0xff]
      %v761 = vld [vmem:[%s645 + $0x10] sm:$0xff]
      %v762 = vld [vmem:[%s645 + $0x18] sm:$0xff]
      %v763 = vld [vmem:[%s648] sm:$0x1]
      %v765 = vlaneseq
      %v766 = vshrl.u32 %v765, 7
      %v767 = vsub.s32 0, %v766
      %v768 = vrot.slane %v763, %v767
      %v771 = vsel %vm699, %v756, 0
      %v774 = vsel %vm699, %v757, 0
      %v777 = vsel %vm699, %v758, 0
      %779 = vmatprep.subr.mxu0 0.0
      %780 = vmatpush1.msra.mxu0 %v759
      %781 = vmatprep.subr.mxu0 0.0
      %782 = vmatpush1.msra.mxu0 %v760
      %783 = vmatprep.subr.mxu0 0.0
      %784 = vmatpush1.msra.mxu0 %v761
      %785 = vmatprep.subr.mxu0 0.0
      %786 = vmatpush1.msra.mxu0 %v762
      %787 = vmatprep.subr.mxu0 0.0
      %788 = vmatpush1.msra.mxu0 0.0
      %789 = vmatprep.subr.mxu0 0.0
      %790 = vmatpush1.msra.mxu0 0.0
      %791 = vmatprep.subr.mxu0 0.0
      %792 = vmatpush1.msra.mxu0 0.0
      %793 = vmatprep.subr.mxu0 0.0
      %794 = vmatpush1.msra.mxu0 0.0
      %795 = vmatprep.subr.mxu0 0.0
      %796 = vmatpush1.msra.mxu0 0.0
      %797 = vmatprep.subr.mxu0 0.0
      %798 = vmatpush1.msra.mxu0 0.0
      %799 = vmatprep.subr.mxu0 0.0
      %800 = vmatpush1.msra.mxu0 0.0
      %801 = vmatprep.subr.mxu0 0.0
      %802 = vmatpush1.msra.mxu0 0.0
      %803 = vmatprep.subr.mxu0 0.0
      %804 = vmatpush1.msra.mxu0 0.0
      %805 = vmatprep.subr.mxu0 0.0
      %806 = vmatpush1.msra.mxu0 0.0
      %807 = vmatprep.subr.mxu0 0.0
      %808 = vmatpush1.msra.mxu0 0.0
      %809 = vmatprep.subr.mxu0 0.0
      %810 = vmatpush1.msra.mxu0 0.0
      %811 = vmatprep.subr.mxu0 0.0
      %812 = vmatpush1.msra.mxu0 0.0
      %813 = vmatprep.subr.mxu0 0.0
      %814 = vmatpush1.msra.mxu0 0.0
      %815 = vmatprep.subr.mxu0 0.0
      %816 = vmatpush1.msra.mxu0 0.0
      %817 = vmatprep.subr.mxu0 0.0
      %818 = vmatpush1.msra.mxu0 0.0
      %819 = vmatprep.subr.mxu0 0.0
      %820 = vmatpush1.msra.mxu0 0.0
      %821 = vmatprep.subr.mxu0 0.0
      %822 = vmatpush1.msra.mxu0 0.0
      %823 = vmatprep.subr.mxu0 0.0
      %824 = vmatpush1.msra.mxu0 0.0
      %825 = vmatprep.subr.mxu0 0.0
      %826 = vmatpush1.msra.mxu0 0.0
      %827 = vmatprep.subr.mxu0 0.0
      %828 = vmatpush1.msra.mxu0 0.0
      %829 = vmatprep.subr.mxu0 0.0
      %830 = vmatpush1.msra.mxu0 0.0
      %831 = vmatprep.subr.mxu0 0.0
      %832 = vmatpush1.msra.mxu0 0.0
      %833 = vmatprep.subr.mxu0 0.0
      %834 = vmatpush1.msra.mxu0 0.0
      %835 = vmatprep.subr.mxu0 0.0
      %836 = vmatpush1.msra.mxu0 0.0
      %837 = vmatprep.subr.mxu0 0.0
      %838 = vmatpush1.msra.mxu0 0.0
      %839 = vmatprep.subr.mxu0 0.0
      %840 = vmatpush1.msra.mxu0 0.0
      %841 = vmatprep.subr.mxu0 0.0
      %842 = vmatpush1.msra.mxu0 0.0
      %843 = vmatprep.mubr.f32.mxu0 0.0
      %844 = vmatmul.mubr.f32.gmra.mrb[0].mxu0 %v771
      %v845 = vpop.f32.mrb[0].mxu0
      %v846 = vadd.f32 %v768, %v845
      %v847 = vpop.f32.mrb[0].mxu0
      %848 = vmatprep.mubr.f32.mxu0 0.0
      %849 = vmatmul.mubr.f32.gmra.mrb[0].mxu0 %v774
      %v850 = vpop.f32.mrb[0].mxu0
      %v851 = vadd.f32 %v768, %v850
      %v852 = vpop.f32.mrb[0].mxu0
      %853 = vmatprep.mubr.f32.mxu0 0.0
      %854 = vmatmul.mubr.f32.gmra.mrb[0].mxu0 %v777
      %v855 = vpop.f32.mrb[0].mxu0
      %v856 = vadd.f32 %v768, %v855
      %v857 = vpop.f32.mrb[0].mxu0
      %858 = vdwg.mxu0
      %862 = vrot.lane.b32.xlu0 %v846, 96
      %v863 = vpop.permute.xlu0 %862
      %864 = vrot.lane.b32.xlu0 %v851, 96
      %v865 = vpop.permute.xlu0 %864
      %866 = vrot.lane.b32.xlu0 %v856, 96
      %v867 = vpop.permute.xlu0 %866
      %vm868 = vcmask 64512
      %v869 = vsel %vm868, %v846, 0
      %v871 = vsel %vm868, %v851, 0
      %v873 = vsel %vm868, %v856, 0
      %v875 = vsel %vm868, %v863, 0
      %v877 = vsel %vm868, %v865, 0
      %v879 = vsel %vm868, %v867, 0
      %881 = vmatprep.subr.mxu0 0.0
      %882 = vmatpush1.xpose.msra.mxu0 %v875
      %883 = vmatprep.subr.mxu0 0.0
      %884 = vmatpush1.xpose.msra.mxu0 %v877
      %885 = vmatprep.subr.mxu0 0.0
      %886 = vmatpush1.xpose.msra.mxu0 %v879
      %887 = vmatprep.subr.mxu0 0.0
      %888 = vmatpush1.xpose.msra.mxu0 0.0
      %889 = vmatprep.subr.mxu0 0.0
      %890 = vmatpush1.xpose.msra.mxu0 0.0
      %891 = vmatprep.subr.mxu0 0.0
      %892 = vmatpush1.xpose.msra.mxu0 0.0
      %893 = vmatprep.subr.mxu0 0.0
      %894 = vmatpush1.xpose.msra.mxu0 0.0
      %895 = vmatprep.subr.mxu0 0.0
      %896 = vmatpush1.xpose.msra.mxu0 0.0
      %897 = vmatprep.subr.mxu0 0.0
      %898 = vmatpush1.xpose.msra.mxu0 0.0
      %899 = vmatprep.subr.mxu0 0.0
      %900 = vmatpush1.xpose.msra.mxu0 0.0
      %901 = vmatprep.subr.mxu0 0.0
      %902 = vmatpush1.xpose.msra.mxu0 0.0
      %903 = vmatprep.subr.mxu0 0.0
      %904 = vmatpush1.xpose.msra.mxu0 0.0
      %905 = vmatprep.subr.mxu0 0.0
      %906 = vmatpush1.xpose.msra.mxu0 0.0
      %907 = vmatprep.subr.mxu0 0.0
      %908 = vmatpush1.xpose.msra.mxu0 0.0
      %909 = vmatprep.subr.mxu0 0.0
      %910 = vmatpush1.xpose.msra.mxu0 0.0
      %911 = vmatprep.subr.mxu0 0.0
      %912 = vmatpush1.xpose.msra.mxu0 0.0
      %913 = vmatprep.subr.mxu0 0.0
      %914 = vmatpush1.xpose.msra.mxu0 0.0
      %915 = vmatprep.subr.mxu0 0.0
      %916 = vmatpush1.xpose.msra.mxu0 0.0
      %917 = vmatprep.subr.mxu0 0.0
      %918 = vmatpush1.xpose.msra.mxu0 0.0
      %919 = vmatprep.subr.mxu0 0.0
      %920 = vmatpush1.xpose.msra.mxu0 0.0
      %921 = vmatprep.subr.mxu0 0.0
      %922 = vmatpush1.xpose.msra.mxu0 0.0
      %923 = vmatprep.subr.mxu0 0.0
      %924 = vmatpush1.xpose.msra.mxu0 0.0
      %925 = vmatprep.subr.mxu0 0.0
      %926 = vmatpush1.xpose.msra.mxu0 0.0
      %927 = vmatprep.subr.mxu0 0.0
      %928 = vmatpush1.xpose.msra.mxu0 0.0
      %929 = vmatprep.subr.mxu0 0.0
      %930 = vmatpush1.xpose.msra.mxu0 0.0
      %931 = vmatprep.subr.mxu0 0.0
      %932 = vmatpush1.xpose.msra.mxu0 0.0
      %933 = vmatprep.subr.mxu0 0.0
      %934 = vmatpush1.xpose.msra.mxu0 0.0
      %935 = vmatprep.subr.mxu0 0.0
      %936 = vmatpush1.xpose.msra.mxu0 0.0
      %937 = vmatprep.subr.mxu0 0.0
      %938 = vmatpush1.xpose.msra.mxu0 0.0
      %939 = vmatprep.subr.mxu0 0.0
      %940 = vmatpush1.xpose.msra.mxu0 0.0
      %941 = vmatprep.subr.mxu0 0.0
      %942 = vmatpush1.xpose.msra.mxu0 0.0
      %943 = vmatprep.subr.mxu0 0.0
      %944 = vmatpush1.xpose.msra.mxu0 0.0
      %945 = vmatprep.mubr.f32.mxu0 0.0
      %946 = vmatmul.mubr.f32.gmra.mrb[0].mxu0 %v869
      %v947 = vpop.f32.mrb[0].mxu0
      %v948 = vadd.f32 %v694, %v947
      %v949 = vpop.f32.mrb[0].mxu0
      %950 = vmatprep.mubr.f32.mxu0 0.0
      %951 = vmatmul.mubr.f32.gmra.mrb[0].mxu0 %v871
      %v952 = vpop.f32.mrb[0].mxu0
      %v953 = vadd.f32 %v695, %v952
      %v954 = vpop.f32.mrb[0].mxu0
      %955 = vmatprep.mubr.f32.mxu0 0.0
      %956 = vmatmul.mubr.f32.gmra.mrb[0].mxu0 %v873
      %v957 = vpop.f32.mrb[0].mxu0
      %v958 = vadd.f32 %v696, %v957
      %v959 = vpop.f32.mrb[0].mxu0
      %960 = vdwg.mxu0
      %vm961 = vcmask 162816
      %v962 = vsel %vm961, %v948, -inf
      %963 = vmax.xlane.f32.xlu0 %v962
      %v964 = vpop.xlane.xlu0 %963
      %v965 = vsel %vm961, %v953, -inf
      %966 = vmax.xlane.f32.xlu0 %v965
      %v967 = vpop.xlane.xlu0 %966
      %vm968 = vcmask 158720
      %v969 = vsel %vm968, %v958, -inf
      %970 = vmax.xlane.f32.xlu0 %v969
      %v971 = vpop.xlane.xlu0 %970
      %v972 = vsub.f32 %v948, %v964
      %v973 = vsub.f32 %v953, %v967
      %v974 = vsub.f32 %v958, %v971
      %v975 = vmul.f32 %v972, 1.442695
      %v976 = vpow.pop %v975
      %v977 = vmul.f32 %v973, 1.442695
      %v978 = vpow.pop %v977
      %v979 = vmul.f32 %v974, 1.442695
      %v980 = vpow.pop %v979
      %v981 = vsel %vm961, %v976, 0.0
      %982 = vadd.xlane.f32.xlu0 %v981
      %v983 = vpop.xlane.xlu0 %982
      %v984 = vsel %vm961, %v978, 0.0
      %985 = vadd.xlane.f32.xlu0 %v984
      %v986 = vpop.xlane.xlu0 %985
      %v987 = vsel %vm968, %v980, 0.0
      %988 = vadd.xlane.f32.xlu0 %v987
      %v989 = vpop.xlane.xlu0 %988
      %v990 = vrcp.pop %v983
      %v991 = vrcp.pop %v986
      %v992 = vrcp.pop %v989
      %v993 = vmul.f32 %v976, %v990
      %v994 = vmul.f32 %v978, %v991
      %v995 = vmul.f32 %v980, %v992
      %996 = vrot.lane.b32.xlu0 %v846, 64
      %v997 = vpop.permute.xlu0 %996
      %998 = vrot.lane.b32.xlu0 %v851, 64
      %v999 = vpop.permute.xlu0 %998
      %1000 = vrot.lane.b32.xlu0 %v856, 64
      %v1001 = vpop.permute.xlu0 %1000
      %v1005 = vsel %vm961, %v993, 0
      %v1008 = vsel %vm961, %v994, 0
      %v1011 = vsel %vm961, %v995, 0
      %vm1013 = vcmask 1043456
      %v1014 = vsel %vm1013, %v1001, 0
      %1016 = vmatprep.subr.mxu0 0.0
      %1017 = vmatpush1.msra.mxu0 %v997
      %1018 = vmatprep.subr.mxu0 0.0
      %1019 = vmatpush1.msra.mxu0 %v999
      %1020 = vmatprep.subr.mxu0 0.0
      %1021 = vmatpush1.msra.mxu0 %v1014
      %1022 = vmatprep.subr.mxu0 0.0
      %1023 = vmatpush1.msra.mxu0 0.0
      %1024 = vmatprep.subr.mxu0 0.0
      %1025 = vmatpush1.msra.mxu0 0.0
      %1026 = vmatprep.subr.mxu0 0.0
      %1027 = vmatpush1.msra.mxu0 0.0
      %1028 = vmatprep.subr.mxu0 0.0
      %1029 = vmatpush1.msra.mxu0 0.0
      %1030 = vmatprep.subr.mxu0 0.0
      %1031 = vmatpush1.msra.mxu0 0.0
      %1032 = vmatprep.subr.mxu0 0.0
      %1033 = vmatpush1.msra.mxu0 0.0
      %1034 = vmatprep.subr.mxu0 0.0
      %1035 = vmatpush1.msra.mxu0 0.0
      %1036 = vmatprep.subr.mxu0 0.0
      %1037 = vmatpush1.msra.mxu0 0.0
      %1038 = vmatprep.subr.mxu0 0.0
      %1039 = vmatpush1.msra.mxu0 0.0
      %1040 = vmatprep.subr.mxu0 0.0
      %1041 = vmatpush1.msra.mxu0 0.0
      %1042 = vmatprep.subr.mxu0 0.0
      %1043 = vmatpush1.msra.mxu0 0.0
      %1044 = vmatprep.subr.mxu0 0.0
      %1045 = vmatpush1.msra.mxu0 0.0
      %1046 = vmatprep.subr.mxu0 0.0
      %1047 = vmatpush1.msra.mxu0 0.0
      %1048 = vmatprep.subr.mxu0 0.0
      %1049 = vmatpush1.msra.mxu0 0.0
      %1050 = vmatprep.subr.mxu0 0.0
      %1051 = vmatpush1.msra.mxu0 0.0
      %1052 = vmatprep.subr.mxu0 0.0
      %1053 = vmatpush1.msra.mxu0 0.0
      %1054 = vmatprep.subr.mxu0 0.0
      %1055 = vmatpush1.msra.mxu0 0.0
      %1056 = vmatprep.subr.mxu0 0.0
      %1057 = vmatpush1.msra.mxu0 0.0
      %1058 = vmatprep.subr.mxu0 0.0
      %1059 = vmatpush1.msra.mxu0 0.0
      %1060 = vmatprep.subr.mxu0 0.0
      %1061 = vmatpush1.msra.mxu0 0.0
      %1062 = vmatprep.subr.mxu0 0.0
      %1063 = vmatpush1.msra.mxu0 0.0
      %1064 = vmatprep.subr.mxu0 0.0
      %1065 = vmatpush1.msra.mxu0 0.0
      %1066 = vmatprep.subr.mxu0 0.0
      %1067 = vmatpush1.msra.mxu0 0.0
      %1068 = vmatprep.subr.mxu0 0.0
      %1069 = vmatpush1.msra.mxu0 0.0
      %1070 = vmatprep.subr.mxu0 0.0
      %1071 = vmatpush1.msra.mxu0 0.0
      %1072 = vmatprep.subr.mxu0 0.0
      %1073 = vmatpush1.msra.mxu0 0.0
      %1074 = vmatprep.subr.mxu0 0.0
      %1075 = vmatpush1.msra.mxu0 0.0
      %1076 = vmatprep.subr.mxu0 0.0
      %1077 = vmatpush1.msra.mxu0 0.0
      %1078 = vmatprep.subr.mxu0 0.0
      %1079 = vmatpush1.msra.mxu0 0.0
      %1080 = vmatprep.mubr.f32.mxu0 0.0
      %1081 = vmatmul.mubr.f32.gmra.mrb[0].mxu0 %v1005
      %v1082 = vpop.f32.mrb[0].mxu0
      %v1083 = vadd.f32 0.0, %v1082
      %v1084 = vpop.f32.mrb[0].mxu0
      %1085 = vmatprep.mubr.f32.mxu0 0.0
      %1086 = vmatmul.mubr.f32.gmra.mrb[0].mxu0 %v1008
      %v1087 = vpop.f32.mrb[0].mxu0
      %v1088 = vadd.f32 0.0, %v1087
      %v1089 = vpop.f32.mrb[0].mxu0
      %1090 = vmatprep.mubr.f32.mxu0 0.0
      %1091 = vmatmul.mubr.f32.gmra.mrb[0].mxu0 %v1011
      %v1092 = vpop.f32.mrb[0].mxu0
      %v1093 = vadd.f32 0.0, %v1092
      %v1094 = vpop.f32.mrb[0].mxu0
      %1095 = vdwg.mxu0
      %1096 = vrot.lane.b32.xlu0 %v846, 120
      %v1097 = vpop.permute.xlu0 %1096
      %1098 = vrot.lane.b32.xlu0 %v851, 120
      %v1099 = vpop.permute.xlu0 %1098
      %1100 = vrot.lane.b32.xlu0 %v856, 120
      %v1101 = vpop.permute.xlu0 %1100
      %1102 = vrot.lane.b32.xlu0 %v846, 88
      %v1103 = vpop.permute.xlu0 %1102
      %1104 = vrot.lane.b32.xlu0 %v851, 88
      %v1105 = vpop.permute.xlu0 %1104
      %1106 = vrot.lane.b32.xlu0 %v856, 88
      %v1107 = vpop.permute.xlu0 %1106
      %v1108 = vsel %vm868, %v1097, 0
      %v1110 = vsel %vm868, %v1099, 0
      %v1112 = vsel %vm868, %v1101, 0
      %v1114 = vsel %vm868, %v1103, 0
      %v1116 = vsel %vm868, %v1105, 0
      %v1118 = vsel %vm868, %v1107, 0
      %1120 = vmatprep.subr.mxu0 0.0
      %1121 = vmatpush1.xpose.msra.mxu0 %v1114
      %1122 = vmatprep.subr.mxu0 0.0
      %1123 = vmatpush1.xpose.msra.mxu0 %v1116
      %1124 = vmatprep.subr.mxu0 0.0
      %1125 = vmatpush1.xpose.msra.mxu0 %v1118
      %1126 = vmatprep.subr.mxu0 0.0
      %1127 = vmatpush1.xpose.msra.mxu0 0.0
      %1128 = vmatprep.subr.mxu0 0.0
      %1129 = vmatpush1.xpose.msra.mxu0 0.0
      %1130 = vmatprep.subr.mxu0 0.0
      %1131 = vmatpush1.xpose.msra.mxu0 0.0
      %1132 = vmatprep.subr.mxu0 0.0
      %1133 = vmatpush1.xpose.msra.mxu0 0.0
      %1134 = vmatprep.subr.mxu0 0.0
      %1135 = vmatpush1.xpose.msra.mxu0 0.0
      %1136 = vmatprep.subr.mxu0 0.0
      %1137 = vmatpush1.xpose.msra.mxu0 0.0
      %1138 = vmatprep.subr.mxu0 0.0
      %1139 = vmatpush1.xpose.msra.mxu0 0.0
      %1140 = vmatprep.subr.mxu0 0.0
      %1141 = vmatpush1.xpose.msra.mxu0 0.0
      %1142 = vmatprep.subr.mxu0 0.0
      %1143 = vmatpush1.xpose.msra.mxu0 0.0
      %1144 = vmatprep.subr.mxu0 0.0
      %1145 = vmatpush1.xpose.msra.mxu0 0.0
      %1146 = vmatprep.subr.mxu0 0.0
      %1147 = vmatpush1.xpose.msra.mxu0 0.0
      %1148 = vmatprep.subr.mxu0 0.0
      %1149 = vmatpush1.xpose.msra.mxu0 0.0
      %1150 = vmatprep.subr.mxu0 0.0
      %1151 = vmatpush1.xpose.msra.mxu0 0.0
      %1152 = vmatprep.subr.mxu0 0.0
      %1153 = vmatpush1.xpose.msra.mxu0 0.0
      %1154 = vmatprep.subr.mxu0 0.0
      %1155 = vmatpush1.xpose.msra.mxu0 0.0
      %1156 = vmatprep.subr.mxu0 0.0
      %1157 = vmatpush1.xpose.msra.mxu0 0.0
      %1158 = vmatprep.subr.mxu0 0.0
      %1159 = vmatpush1.xpose.msra.mxu0 0.0
      %1160 = vmatprep.subr.mxu0 0.0
      %1161 = vmatpush1.xpose.msra.mxu0 0.0
      %1162 = vmatprep.subr.mxu0 0.0
      %1163 = vmatpush1.xpose.msra.mxu0 0.0
      %1164 = vmatprep.subr.mxu0 0.0
      %1165 = vmatpush1.xpose.msra.mxu0 0.0
      %1166 = vmatprep.subr.mxu0 0.0
      %1167 = vmatpush1.xpose.msra.mxu0 0.0
      %1168 = vmatprep.subr.mxu0 0.0
      %1169 = vmatpush1.xpose.msra.mxu0 0.0
      %1170 = vmatprep.subr.mxu0 0.0
      %1171 = vmatpush1.xpose.msra.mxu0 0.0
      %1172 = vmatprep.subr.mxu0 0.0
      %1173 = vmatpush1.xpose.msra.mxu0 0.0
      %1174 = vmatprep.subr.mxu0 0.0
      %1175 = vmatpush1.xpose.msra.mxu0 0.0
      %1176 = vmatprep.subr.mxu0 0.0
      %1177 = vmatpush1.xpose.msra.mxu0 0.0
      %1178 = vmatprep.subr.mxu0 0.0
      %1179 = vmatpush1.xpose.msra.mxu0 0.0
      %1180 = vmatprep.subr.mxu0 0.0
      %1181 = vmatpush1.xpose.msra.mxu0 0.0
      %1182 = vmatprep.subr.mxu0 0.0
      %1183 = vmatpush1.xpose.msra.mxu0 0.0
      %1184 = vmatprep.mubr.f32.mxu0 0.0
      %1185 = vmatmul.mubr.f32.gmra.mrb[0].mxu0 %v1108
      %v1186 = vpop.f32.mrb[0].mxu0
      %v1187 = vadd.f32 %v694, %v1186
      %v1188 = vpop.f32.mrb[0].mxu0
      %1189 = vmatprep.mubr.f32.mxu0 0.0
      %1190 = vmatmul.mubr.f32.gmra.mrb[0].mxu0 %v1110
      %v1191 = vpop.f32.mrb[0].mxu0
      %v1192 = vadd.f32 %v695, %v1191
      %v1193 = vpop.f32.mrb[0].mxu0
      %1194 = vmatprep.mubr.f32.mxu0 0.0
      %1195 = vmatmul.mubr.f32.gmra.mrb[0].mxu0 %v1112
      %v1196 = vpop.f32.mrb[0].mxu0
      %v1197 = vadd.f32 %v696, %v1196
      %v1198 = vpop.f32.mrb[0].mxu0
      %1199 = vdwg.mxu0
      %v1200 = vsel %vm961, %v1187, -inf
      %1201 = vmax.xlane.f32.xlu0 %v1200
      %v1202 = vpop.xlane.xlu0 %1201
      %v1203 = vsel %vm961, %v1192, -inf
      %1204 = vmax.xlane.f32.xlu0 %v1203
      %v1205 = vpop.xlane.xlu0 %1204
      %v1206 = vsel %vm968, %v1197, -inf
      %1207 = vmax.xlane.f32.xlu0 %v1206
      %v1208 = vpop.xlane.xlu0 %1207
      %v1209 = vsub.f32 %v1187, %v1202
      %v1210 = vsub.f32 %v1192, %v1205
      %v1211 = vsub.f32 %v1197, %v1208
      %v1212 = vmul.f32 %v1209, 1.442695
      %v1213 = vpow.pop %v1212
      %v1214 = vmul.f32 %v1210, 1.442695
      %v1215 = vpow.pop %v1214
      %v1216 = vmul.f32 %v1211, 1.442695
      %v1217 = vpow.pop %v1216
      %v1218 = vsel %vm961, %v1213, 0.0
      %1219 = vadd.xlane.f32.xlu0 %v1218
      %v1220 = vpop.xlane.xlu0 %1219
      %v1221 = vsel %vm961, %v1215, 0.0
      %1222 = vadd.xlane.f32.xlu0 %v1221
      %v1223 = vpop.xlane.xlu0 %1222
      %v1224 = vsel %vm968, %v1217, 0.0
      %1225 = vadd.xlane.f32.xlu0 %v1224
      %v1226 = vpop.xlane.xlu0 %1225
      %v1227 = vrcp.pop %v1220
      %v1228 = vrcp.pop %v1223
      %v1229 = vrcp.pop %v1226
      %v1230 = vmul.f32 %v1213, %v1227
      %v1231 = vmul.f32 %v1215, %v1228
      %v1232 = vmul.f32 %v1217, %v1229
      %1233 = vrot.lane.b32.xlu0 %v846, 56
      %v1234 = vpop.permute.xlu0 %1233
      %1235 = vrot.lane.b32.xlu0 %v851, 56
      %v1236 = vpop.permute.xlu0 %1235
      %1237 = vrot.lane.b32.xlu0 %v856, 56
      %v1238 = vpop.permute.xlu0 %1237
      %v1242 = vsel %vm961, %v1230, 0
      %v1245 = vsel %vm961, %v1231, 0
      %v1248 = vsel %vm961, %v1232, 0
      %v1250 = vsel %vm1013, %v1238, 0
      %1252 = vmatprep.subr.mxu0 0.0
      %1253 = vmatpush1.msra.mxu0 %v1234
      %1254 = vmatprep.subr.mxu0 0.0
      %1255 = vmatpush1.msra.mxu0 %v1236
      %1256 = vmatprep.subr.mxu0 0.0
      %1257 = vmatpush1.msra.mxu0 %v1250
      %1258 = vmatprep.subr.mxu0 0.0
      %1259 = vmatpush1.msra.mxu0 0.0
      %1260 = vmatprep.subr.mxu0 0.0
      %1261 = vmatpush1.msra.mxu0 0.0
      %1262 = vmatprep.subr.mxu0 0.0
      %1263 = vmatpush1.msra.mxu0 0.0
      %1264 = vmatprep.subr.mxu0 0.0
      %1265 = vmatpush1.msra.mxu0 0.0
      %1266 = vmatprep.subr.mxu0 0.0
      %1267 = vmatpush1.msra.mxu0 0.0
      %1268 = vmatprep.subr.mxu0 0.0
      %1269 = vmatpush1.msra.mxu0 0.0
      %1270 = vmatprep.subr.mxu0 0.0
      %1271 = vmatpush1.msra.mxu0 0.0
      %1272 = vmatprep.subr.mxu0 0.0
      %1273 = vmatpush1.msra.mxu0 0.0
      %1274 = vmatprep.subr.mxu0 0.0
      %1275 = vmatpush1.msra.mxu0 0.0
      %1276 = vmatprep.subr.mxu0 0.0
      %1277 = vmatpush1.msra.mxu0 0.0
      %1278 = vmatprep.subr.mxu0 0.0
      %1279 = vmatpush1.msra.mxu0 0.0
      %1280 = vmatprep.subr.mxu0 0.0
      %1281 = vmatpush1.msra.mxu0 0.0
      %1282 = vmatprep.subr.mxu0 0.0
      %1283 = vmatpush1.msra.mxu0 0.0
      %1284 = vmatprep.subr.mxu0 0.0
      %1285 = vmatpush1.msra.mxu0 0.0
      %1286 = vmatprep.subr.mxu0 0.0
      %1287 = vmatpush1.msra.mxu0 0.0
      %1288 = vmatprep.subr.mxu0 0.0
      %1289 = vmatpush1.msra.mxu0 0.0
      %1290 = vmatprep.subr.mxu0 0.0
      %1291 = vmatpush1.msra.mxu0 0.0
      %1292 = vmatprep.subr.mxu0 0.0
      %1293 = vmatpush1.msra.mxu0 0.0
      %1294 = vmatprep.subr.mxu0 0.0
      %1295 = vmatpush1.msra.mxu0 0.0
      %1296 = vmatprep.subr.mxu0 0.0
      %1297 = vmatpush1.msra.mxu0 0.0
      %1298 = vmatprep.subr.mxu0 0.0
      %1299 = vmatpush1.msra.mxu0 0.0
      %1300 = vmatprep.subr.mxu0 0.0
      %1301 = vmatpush1.msra.mxu0 0.0
      %1302 = vmatprep.subr.mxu0 0.0
      %1303 = vmatpush1.msra.mxu0 0.0
      %1304 = vmatprep.subr.mxu0 0.0
      %1305 = vmatpush1.msra.mxu0 0.0
      %1306 = vmatprep.subr.mxu0 0.0
      %1307 = vmatpush1.msra.mxu0 0.0
      %1308 = vmatprep.subr.mxu0 0.0
      %1309 = vmatpush1.msra.mxu0 0.0
      %1310 = vmatprep.subr.mxu0 0.0
      %1311 = vmatpush1.msra.mxu0 0.0
      %1312 = vmatprep.subr.mxu0 0.0
      %1313 = vmatpush1.msra.mxu0 0.0
      %1314 = vmatprep.subr.mxu0 0.0
      %1315 = vmatpush1.msra.mxu0 0.0
      %1316 = vmatprep.mubr.f32.mxu0 0.0
      %1317 = vmatmul.mubr.f32.gmra.mrb[0].mxu0 %v1242
      %v1318 = vpop.f32.mrb[0].mxu0
      %v1319 = vadd.f32 0.0, %v1318
      %v1320 = vpop.f32.mrb[0].mxu0
      %1321 = vmatprep.mubr.f32.mxu0 0.0
      %1322 = vmatmul.mubr.f32.gmra.mrb[0].mxu0 %v1245
      %v1323 = vpop.f32.mrb[0].mxu0
      %v1324 = vadd.f32 0.0, %v1323
      %v1325 = vpop.f32.mrb[0].mxu0
      %1326 = vmatprep.mubr.f32.mxu0 0.0
      %1327 = vmatmul.mubr.f32.gmra.mrb[0].mxu0 %v1248
      %v1328 = vpop.f32.mrb[0].mxu0
      %v1329 = vadd.f32 0.0, %v1328
      %v1330 = vpop.f32.mrb[0].mxu0
      %1331 = vdwg.mxu0
      %1332 = vrot.lane.b32.xlu0 %v846, 112
      %v1333 = vpop.permute.xlu0 %1332
      %1334 = vrot.lane.b32.xlu0 %v851, 112
      %v1335 = vpop.permute.xlu0 %1334
      %1336 = vrot.lane.b32.xlu0 %v856, 112
      %v1337 = vpop.permute.xlu0 %1336
      %1338 = vrot.lane.b32.xlu0 %v846, 80
      %v1339 = vpop.permute.xlu0 %1338
      %1340 = vrot.lane.b32.xlu0 %v851, 80
      %v1341 = vpop.permute.xlu0 %1340
      %1342 = vrot.lane.b32.xlu0 %v856, 80
      %v1343 = vpop.permute.xlu0 %1342
      %v1344 = vsel %vm868, %v1333, 0
      %v1346 = vsel %vm868, %v1335, 0
      %v1348 = vsel %vm868, %v1337, 0
      %v1350 = vsel %vm868, %v1339, 0
      %v1352 = vsel %vm868, %v1341, 0
      %v1354 = vsel %vm868, %v1343, 0
      %1356 = vmatprep.subr.mxu0 0.0
      %1357 = vmatpush1.xpose.msra.mxu0 %v1350
      %1358 = vmatprep.subr.mxu0 0.0
      %1359 = vmatpush1.xpose.msra.mxu0 %v1352
      %1360 = vmatprep.subr.mxu0 0.0
      %1361 = vmatpush1.xpose.msra.mxu0 %v1354
      %1362 = vmatprep.subr.mxu0 0.0
      %1363 = vmatpush1.xpose.msra.mxu0 0.0
      %1364 = vmatprep.subr.mxu0 0.0
      %1365 = vmatpush1.xpose.msra.mxu0 0.0
      %1366 = vmatprep.subr.mxu0 0.0
      %1367 = vmatpush1.xpose.msra.mxu0 0.0
      %1368 = vmatprep.subr.mxu0 0.0
      %1369 = vmatpush1.xpose.msra.mxu0 0.0
      %1370 = vmatprep.subr.mxu0 0.0
      %1371 = vmatpush1.xpose.msra.mxu0 0.0
      %1372 = vmatprep.subr.mxu0 0.0
      %1373 = vmatpush1.xpose.msra.mxu0 0.0
      %1374 = vmatprep.subr.mxu0 0.0
      %1375 = vmatpush1.xpose.msra.mxu0 0.0
      %1376 = vmatprep.subr.mxu0 0.0
      %1377 = vmatpush1.xpose.msra.mxu0 0.0
      %1378 = vmatprep.subr.mxu0 0.0
      %1379 = vmatpush1.xpose.msra.mxu0 0.0
      %1380 = vmatprep.subr.mxu0 0.0
      %1381 = vmatpush1.xpose.msra.mxu0 0.0
      %1382 = vmatprep.subr.mxu0 0.0
      %1383 = vmatpush1.xpose.msra.mxu0 0.0
      %1384 = vmatprep.subr.mxu0 0.0
      %1385 = vmatpush1.xpose.msra.mxu0 0.0
      %1386 = vmatprep.subr.mxu0 0.0
      %1387 = vmatpush1.xpose.msra.mxu0 0.0
      %1388 = vmatprep.subr.mxu0 0.0
      %1389 = vmatpush1.xpose.msra.mxu0 0.0
      %1390 = vmatprep.subr.mxu0 0.0
      %1391 = vmatpush1.xpose.msra.mxu0 0.0
      %1392 = vmatprep.subr.mxu0 0.0
      %1393 = vmatpush1.xpose.msra.mxu0 0.0
      %1394 = vmatprep.subr.mxu0 0.0
      %1395 = vmatpush1.xpose.msra.mxu0 0.0
      %1396 = vmatprep.subr.mxu0 0.0
      %1397 = vmatpush1.xpose.msra.mxu0 0.0
      %1398 = vmatprep.subr.mxu0 0.0
      %1399 = vmatpush1.xpose.msra.mxu0 0.0
      %1400 = vmatprep.subr.mxu0 0.0
      %1401 = vmatpush1.xpose.msra.mxu0 0.0
      %1402 = vmatprep.subr.mxu0 0.0
      %1403 = vmatpush1.xpose.msra.mxu0 0.0
      %1404 = vmatprep.subr.mxu0 0.0
      %1405 = vmatpush1.xpose.msra.mxu0 0.0
      %1406 = vmatprep.subr.mxu0 0.0
      %1407 = vmatpush1.xpose.msra.mxu0 0.0
      %1408 = vmatprep.subr.mxu0 0.0
      %1409 = vmatpush1.xpose.msra.mxu0 0.0
      %1410 = vmatprep.subr.mxu0 0.0
      %1411 = vmatpush1.xpose.msra.mxu0 0.0
      %1412 = vmatprep.subr.mxu0 0.0
      %1413 = vmatpush1.xpose.msra.mxu0 0.0
      %1414 = vmatprep.subr.mxu0 0.0
      %1415 = vmatpush1.xpose.msra.mxu0 0.0
      %1416 = vmatprep.subr.mxu0 0.0
      %1417 = vmatpush1.xpose.msra.mxu0 0.0
      %1418 = vmatprep.subr.mxu0 0.0
      %1419 = vmatpush1.xpose.msra.mxu0 0.0
      %1420 = vmatprep.mubr.f32.mxu0 0.0
      %1421 = vmatmul.mubr.f32.gmra.mrb[0].mxu0 %v1344
      %v1422 = vpop.f32.mrb[0].mxu0
      %v1423 = vadd.f32 %v694, %v1422
      %v1424 = vpop.f32.mrb[0].mxu0
      %1425 = vmatprep.mubr.f32.mxu0 0.0
      %1426 = vmatmul.mubr.f32.gmra.mrb[0].mxu0 %v1346
      %v1427 = vpop.f32.mrb[0].mxu0
      %v1428 = vadd.f32 %v695, %v1427
      %v1429 = vpop.f32.mrb[0].mxu0
      %1430 = vmatprep.mubr.f32.mxu0 0.0
      %1431 = vmatmul.mubr.f32.gmra.mrb[0].mxu0 %v1348
      %v1432 = vpop.f32.mrb[0].mxu0
      %v1433 = vadd.f32 %v696, %v1432
      %v1434 = vpop.f32.mrb[0].mxu0
      %1435 = vdwg.mxu0
      %v1436 = vsel %vm961, %v1423, -inf
      %1437 = vmax.xlane.f32.xlu0 %v1436
      %v1438 = vpop.xlane.xlu0 %1437
      %v1439 = vsel %vm961, %v1428, -inf
      %1440 = vmax.xlane.f32.xlu0 %v1439
      %v1441 = vpop.xlane.xlu0 %1440
      %v1442 = vsel %vm968, %v1433, -inf
      %1443 = vmax.xlane.f32.xlu0 %v1442
      %v1444 = vpop.xlane.xlu0 %1443
      %v1445 = vsub.f32 %v1423, %v1438
      %v1446 = vsub.f32 %v1428, %v1441
      %v1447 = vsub.f32 %v1433, %v1444
      %v1448 = vmul.f32 %v1445, 1.442695
      %v1449 = vpow.pop %v1448
      %v1450 = vmul.f32 %v1446, 1.442695
      %v1451 = vpow.pop %v1450
      %v1452 = vmul.f32 %v1447, 1.442695
      %v1453 = vpow.pop %v1452
      %v1454 = vsel %vm961, %v1449, 0.0
      %1455 = vadd.xlane.f32.xlu0 %v1454
      %v1456 = vpop.xlane.xlu0 %1455
      %v1457 = vsel %vm961, %v1451, 0.0
      %1458 = vadd.xlane.f32.xlu0 %v1457
      %v1459 = vpop.xlane.xlu0 %1458
      %v1460 = vsel %vm968, %v1453, 0.0
      %1461 = vadd.xlane.f32.xlu0 %v1460
      %v1462 = vpop.xlane.xlu0 %1461
      %v1463 = vrcp.pop %v1456
      %v1464 = vrcp.pop %v1459
      %v1465 = vrcp.pop %v1462
      %v1466 = vmul.f32 %v1449, %v1463
      %v1467 = vmul.f32 %v1451, %v1464
      %v1468 = vmul.f32 %v1453, %v1465
      %1469 = vrot.lane.b32.xlu0 %v846, 48
      %v1470 = vpop.permute.xlu0 %1469
      %1471 = vrot.lane.b32.xlu0 %v851, 48
      %v1472 = vpop.permute.xlu0 %1471
      %1473 = vrot.lane.b32.xlu0 %v856, 48
      %v1474 = vpop.permute.xlu0 %1473
      %v1478 = vsel %vm961, %v1466, 0
      %v1481 = vsel %vm961, %v1467, 0
      %v1484 = vsel %vm961, %v1468, 0
      %v1486 = vsel %vm1013, %v1474, 0
      %1488 = vmatprep.subr.mxu0 0.0
      %1489 = vmatpush1.msra.mxu0 %v1470
      %1490 = vmatprep.subr.mxu0 0.0
      %1491 = vmatpush1.msra.mxu0 %v1472
      %1492 = vmatprep.subr.mxu0 0.0
      %1493 = vmatpush1.msra.mxu0 %v1486
      %1494 = vmatprep.subr.mxu0 0.0
      %1495 = vmatpush1.msra.mxu0 0.0
      %1496 = vmatprep.subr.mxu0 0.0
      %1497 = vmatpush1.msra.mxu0 0.0
      %1498 = vmatprep.subr.mxu0 0.0
      %1499 = vmatpush1.msra.mxu0 0.0
      %1500 = vmatprep.subr.mxu0 0.0
      %1501 = vmatpush1.msra.mxu0 0.0
      %1502 = vmatprep.subr.mxu0 0.0
      %1503 = vmatpush1.msra.mxu0 0.0
      %1504 = vmatprep.subr.mxu0 0.0
      %1505 = vmatpush1.msra.mxu0 0.0
      %1506 = vmatprep.subr.mxu0 0.0
      %1507 = vmatpush1.msra.mxu0 0.0
      %1508 = vmatprep.subr.mxu0 0.0
      %1509 = vmatpush1.msra.mxu0 0.0
      %1510 = vmatprep.subr.mxu0 0.0
      %1511 = vmatpush1.msra.mxu0 0.0
      %1512 = vmatprep.subr.mxu0 0.0
      %1513 = vmatpush1.msra.mxu0 0.0
      %1514 = vmatprep.subr.mxu0 0.0
      %1515 = vmatpush1.msra.mxu0 0.0
      %1516 = vmatprep.subr.mxu0 0.0
      %1517 = vmatpush1.msra.mxu0 0.0
      %1518 = vmatprep.subr.mxu0 0.0
      %1519 = vmatpush1.msra.mxu0 0.0
      %1520 = vmatprep.subr.mxu0 0.0
      %1521 = vmatpush1.msra.mxu0 0.0
      %1522 = vmatprep.subr.mxu0 0.0
      %1523 = vmatpush1.msra.mxu0 0.0
      %1524 = vmatprep.subr.mxu0 0.0
      %1525 = vmatpush1.msra.mxu0 0.0
      %1526 = vmatprep.subr.mxu0 0.0
      %1527 = vmatpush1.msra.mxu0 0.0
      %1528 = vmatprep.subr.mxu0 0.0
      %1529 = vmatpush1.msra.mxu0 0.0
      %1530 = vmatprep.subr.mxu0 0.0
      %1531 = vmatpush1.msra.mxu0 0.0
      %1532 = vmatprep.subr.mxu0 0.0
      %1533 = vmatpush1.msra.mxu0 0.0
      %1534 = vmatprep.subr.mxu0 0.0
      %1535 = vmatpush1.msra.mxu0 0.0
      %1536 = vmatprep.subr.mxu0 0.0
      %1537 = vmatpush1.msra.mxu0 0.0
      %1538 = vmatprep.subr.mxu0 0.0
      %1539 = vmatpush1.msra.mxu0 0.0
      %1540 = vmatprep.subr.mxu0 0.0
      %1541 = vmatpush1.msra.mxu0 0.0
      %1542 = vmatprep.subr.mxu0 0.0
      %1543 = vmatpush1.msra.mxu0 0.0
      %1544 = vmatprep.subr.mxu0 0.0
      %1545 = vmatpush1.msra.mxu0 0.0
      %1546 = vmatprep.subr.mxu0 0.0
      %1547 = vmatpush1.msra.mxu0 0.0
      %1548 = vmatprep.subr.mxu0 0.0
      %1549 = vmatpush1.msra.mxu0 0.0
      %1550 = vmatprep.subr.mxu0 0.0
      %1551 = vmatpush1.msra.mxu0 0.0
      %1552 = vmatprep.mubr.f32.mxu0 0.0
      %1553 = vmatmul.mubr.f32.gmra.mrb[0].mxu0 %v1478
      %v1554 = vpop.f32.mrb[0].mxu0
      %v1555 = vadd.f32 0.0, %v1554
      %v1556 = vpop.f32.mrb[0].mxu0
      %1557 = vmatprep.mubr.f32.mxu0 0.0
      %1558 = vmatmul.mubr.f32.gmra.mrb[0].mxu0 %v1481
      %v1559 = vpop.f32.mrb[0].mxu0
      %v1560 = vadd.f32 0.0, %v1559
      %v1561 = vpop.f32.mrb[0].mxu0
      %1562 = vmatprep.mubr.f32.mxu0 0.0
      %1563 = vmatmul.mubr.f32.gmra.mrb[0].mxu0 %v1484
      %v1564 = vpop.f32.mrb[0].mxu0
      %v1565 = vadd.f32 0.0, %v1564
      %v1566 = vpop.f32.mrb[0].mxu0
      %1567 = vdwg.mxu0
      %1568 = vrot.lane.b32.xlu0 %v846, 104
      %v1569 = vpop.permute.xlu0 %1568
      %1570 = vrot.lane.b32.xlu0 %v851, 104
      %v1571 = vpop.permute.xlu0 %1570
      %1572 = vrot.lane.b32.xlu0 %v856, 104
      %v1573 = vpop.permute.xlu0 %1572
      %1574 = vrot.lane.b32.xlu0 %v846, 72
      %v1575 = vpop.permute.xlu0 %1574
      %1576 = vrot.lane.b32.xlu0 %v851, 72
      %v1577 = vpop.permute.xlu0 %1576
      %1578 = vrot.lane.b32.xlu0 %v856, 72
      %v1579 = vpop.permute.xlu0 %1578
      %v1580 = vsel %vm868, %v1569, 0
      %v1582 = vsel %vm868, %v1571, 0
      %v1584 = vsel %vm868, %v1573, 0
      %v1586 = vsel %vm868, %v1575, 0
      %v1588 = vsel %vm868, %v1577, 0
      %v1590 = vsel %vm868, %v1579, 0
      %1592 = vmatprep.subr.mxu0 0.0
      %1593 = vmatpush1.xpose.msra.mxu0 %v1586
      %1594 = vmatprep.subr.mxu0 0.0
      %1595 = vmatpush1.xpose.msra.mxu0 %v1588
      %1596 = vmatprep.subr.mxu0 0.0
      %1597 = vmatpush1.xpose.msra.mxu0 %v1590
      %1598 = vmatprep.subr.mxu0 0.0
      %1599 = vmatpush1.xpose.msra.mxu0 0.0
      %1600 = vmatprep.subr.mxu0 0.0
      %1601 = vmatpush1.xpose.msra.mxu0 0.0
      %1602 = vmatprep.subr.mxu0 0.0
      %1603 = vmatpush1.xpose.msra.mxu0 0.0
      %1604 = vmatprep.subr.mxu0 0.0
      %1605 = vmatpush1.xpose.msra.mxu0 0.0
      %1606 = vmatprep.subr.mxu0 0.0
      %1607 = vmatpush1.xpose.msra.mxu0 0.0
      %1608 = vmatprep.subr.mxu0 0.0
      %1609 = vmatpush1.xpose.msra.mxu0 0.0
      %1610 = vmatprep.subr.mxu0 0.0
      %1611 = vmatpush1.xpose.msra.mxu0 0.0
      %1612 = vmatprep.subr.mxu0 0.0
      %1613 = vmatpush1.xpose.msra.mxu0 0.0
      %1614 = vmatprep.subr.mxu0 0.0
      %1615 = vmatpush1.xpose.msra.mxu0 0.0
      %1616 = vmatprep.subr.mxu0 0.0
      %1617 = vmatpush1.xpose.msra.mxu0 0.0
      %1618 = vmatprep.subr.mxu0 0.0
      %1619 = vmatpush1.xpose.msra.mxu0 0.0
      %1620 = vmatprep.subr.mxu0 0.0
      %1621 = vmatpush1.xpose.msra.mxu0 0.0
      %1622 = vmatprep.subr.mxu0 0.0
      %1623 = vmatpush1.xpose.msra.mxu0 0.0
      %1624 = vmatprep.subr.mxu0 0.0
      %1625 = vmatpush1.xpose.msra.mxu0 0.0
      %1626 = vmatprep.subr.mxu0 0.0
      %1627 = vmatpush1.xpose.msra.mxu0 0.0
      %1628 = vmatprep.subr.mxu0 0.0
      %1629 = vmatpush1.xpose.msra.mxu0 0.0
      %1630 = vmatprep.subr.mxu0 0.0
      %1631 = vmatpush1.xpose.msra.mxu0 0.0
      %1632 = vmatprep.subr.mxu0 0.0
      %1633 = vmatpush1.xpose.msra.mxu0 0.0
      %1634 = vmatprep.subr.mxu0 0.0
      %1635 = vmatpush1.xpose.msra.mxu0 0.0
      %1636 = vmatprep.subr.mxu0 0.0
      %1637 = vmatpush1.xpose.msra.mxu0 0.0
      %1638 = vmatprep.subr.mxu0 0.0
      %1639 = vmatpush1.xpose.msra.mxu0 0.0
      %1640 = vmatprep.subr.mxu0 0.0
      %1641 = vmatpush1.xpose.msra.mxu0 0.0
      %1642 = vmatprep.subr.mxu0 0.0
      %1643 = vmatpush1.xpose.msra.mxu0 0.0
      %1644 = vmatprep.subr.mxu0 0.0
      %1645 = vmatpush1.xpose.msra.mxu0 0.0
      %1646 = vmatprep.subr.mxu0 0.0
      %1647 = vmatpush1.xpose.msra.mxu0 0.0
      %1648 = vmatprep.subr.mxu0 0.0
      %1649 = vmatpush1.xpose.msra.mxu0 0.0
      %1650 = vmatprep.subr.mxu0 0.0
      %1651 = vmatpush1.xpose.msra.mxu0 0.0
      %1652 = vmatprep.subr.mxu0 0.0
      %1653 = vmatpush1.xpose.msra.mxu0 0.0
      %1654 = vmatprep.subr.mxu0 0.0
      %1655 = vmatpush1.xpose.msra.mxu0 0.0
      %1656 = vmatprep.mubr.f32.mxu0 0.0
      %1657 = vmatmul.mubr.f32.gmra.mrb[0].mxu0 %v1580
      %v1658 = vpop.f32.mrb[0].mxu0
      %v1659 = vadd.f32 %v694, %v1658
      %v1660 = vpop.f32.mrb[0].mxu0
      %1661 = vmatprep.mubr.f32.mxu0 0.0
      %1662 = vmatmul.mubr.f32.gmra.mrb[0].mxu0 %v1582
      %v1663 = vpop.f32.mrb[0].mxu0
      %v1664 = vadd.f32 %v695, %v1663
      %v1665 = vpop.f32.mrb[0].mxu0
      %1666 = vmatprep.mubr.f32.mxu0 0.0
      %1667 = vmatmul.mubr.f32.gmra.mrb[0].mxu0 %v1584
      %v1668 = vpop.f32.mrb[0].mxu0
      %v1669 = vadd.f32 %v696, %v1668
      %v1670 = vpop.f32.mrb[0].mxu0
      %1671 = vdwg.mxu0
      %v1672 = vsel %vm961, %v1659, -inf
      %1673 = vmax.xlane.f32.xlu0 %v1672
      %v1674 = vpop.xlane.xlu0 %1673
      %v1675 = vsel %vm961, %v1664, -inf
      %1676 = vmax.xlane.f32.xlu0 %v1675
      %v1677 = vpop.xlane.xlu0 %1676
      %v1678 = vsel %vm968, %v1669, -inf
      %1679 = vmax.xlane.f32.xlu0 %v1678
      %v1680 = vpop.xlane.xlu0 %1679
      %v1681 = vsub.f32 %v1659, %v1674
      %v1682 = vsub.f32 %v1664, %v1677
      %v1683 = vsub.f32 %v1669, %v1680
      %v1684 = vmul.f32 %v1681, 1.442695
      %v1685 = vpow.pop %v1684
      %v1686 = vmul.f32 %v1682, 1.442695
      %v1687 = vpow.pop %v1686
      %v1688 = vmul.f32 %v1683, 1.442695
      %v1689 = vpow.pop %v1688
      %v1690 = vsel %vm961, %v1685, 0.0
      %1691 = vadd.xlane.f32.xlu0 %v1690
      %v1692 = vpop.xlane.xlu0 %1691
      %v1693 = vsel %vm961, %v1687, 0.0
      %1694 = vadd.xlane.f32.xlu0 %v1693
      %v1695 = vpop.xlane.xlu0 %1694
      %v1696 = vsel %vm968, %v1689, 0.0
      %1697 = vadd.xlane.f32.xlu0 %v1696
      %v1698 = vpop.xlane.xlu0 %1697
      %v1699 = vrcp.pop %v1692
      %v1700 = vrcp.pop %v1695
      %v1701 = vrcp.pop %v1698
      %v1702 = vmul.f32 %v1685, %v1699
      %v1703 = vmul.f32 %v1687, %v1700
      %v1704 = vmul.f32 %v1689, %v1701
      %1705 = vrot.lane.b32.xlu0 %v846, 40
      %v1706 = vpop.permute.xlu0 %1705
      %1707 = vrot.lane.b32.xlu0 %v851, 40
      %v1708 = vpop.permute.xlu0 %1707
      %1709 = vrot.lane.b32.xlu0 %v856, 40
      %v1710 = vpop.permute.xlu0 %1709
      %v1714 = vsel %vm961, %v1702, 0
      %v1717 = vsel %vm961, %v1703, 0
      %v1720 = vsel %vm961, %v1704, 0
      %v1722 = vsel %vm1013, %v1710, 0
      %1724 = vmatprep.subr.mxu0 0.0
      %1725 = vmatpush1.msra.mxu0 %v1706
      %1726 = vmatprep.subr.mxu0 0.0
      %1727 = vmatpush1.msra.mxu0 %v1708
      %1728 = vmatprep.subr.mxu0 0.0
      %1729 = vmatpush1.msra.mxu0 %v1722
      %1730 = vmatprep.subr.mxu0 0.0
      %1731 = vmatpush1.msra.mxu0 0.0
      %1732 = vmatprep.subr.mxu0 0.0
      %1733 = vmatpush1.msra.mxu0 0.0
      %1734 = vmatprep.subr.mxu0 0.0
      %1735 = vmatpush1.msra.mxu0 0.0
      %1736 = vmatprep.subr.mxu0 0.0
      %1737 = vmatpush1.msra.mxu0 0.0
      %1738 = vmatprep.subr.mxu0 0.0
      %1739 = vmatpush1.msra.mxu0 0.0
      %1740 = vmatprep.subr.mxu0 0.0
      %1741 = vmatpush1.msra.mxu0 0.0
      %1742 = vmatprep.subr.mxu0 0.0
      %1743 = vmatpush1.msra.mxu0 0.0
      %1744 = vmatprep.subr.mxu0 0.0
      %1745 = vmatpush1.msra.mxu0 0.0
      %1746 = vmatprep.subr.mxu0 0.0
      %1747 = vmatpush1.msra.mxu0 0.0
      %1748 = vmatprep.subr.mxu0 0.0
      %1749 = vmatpush1.msra.mxu0 0.0
      %1750 = vmatprep.subr.mxu0 0.0
      %1751 = vmatpush1.msra.mxu0 0.0
      %1752 = vmatprep.subr.mxu0 0.0
      %1753 = vmatpush1.msra.mxu0 0.0
      %1754 = vmatprep.subr.mxu0 0.0
      %1755 = vmatpush1.msra.mxu0 0.0
      %1756 = vmatprep.subr.mxu0 0.0
      %1757 = vmatpush1.msra.mxu0 0.0
      %1758 = vmatprep.subr.mxu0 0.0
      %1759 = vmatpush1.msra.mxu0 0.0
      %1760 = vmatprep.subr.mxu0 0.0
      %1761 = vmatpush1.msra.mxu0 0.0
      %1762 = vmatprep.subr.mxu0 0.0
      %1763 = vmatpush1.msra.mxu0 0.0
      %1764 = vmatprep.subr.mxu0 0.0
      %1765 = vmatpush1.msra.mxu0 0.0
      %1766 = vmatprep.subr.mxu0 0.0
      %1767 = vmatpush1.msra.mxu0 0.0
      %1768 = vmatprep.subr.mxu0 0.0
      %1769 = vmatpush1.msra.mxu0 0.0
      %1770 = vmatprep.subr.mxu0 0.0
      %1771 = vmatpush1.msra.mxu0 0.0
      %1772 = vmatprep.subr.mxu0 0.0
      %1773 = vmatpush1.msra.mxu0 0.0
      %1774 = vmatprep.subr.mxu0 0.0
      %1775 = vmatpush1.msra.mxu0 0.0
      %1776 = vmatprep.subr.mxu0 0.0
      %1777 = vmatpush1.msra.mxu0 0.0
      %1778 = vmatprep.subr.mxu0 0.0
      %1779 = vmatpush1.msra.mxu0 0.0
      %1780 = vmatprep.subr.mxu0 0.0
      %1781 = vmatpush1.msra.mxu0 0.0
      %1782 = vmatprep.subr.mxu0 0.0
      %1783 = vmatpush1.msra.mxu0 0.0
      %1784 = vmatprep.subr.mxu0 0.0
      %1785 = vmatpush1.msra.mxu0 0.0
      %1786 = vmatprep.subr.mxu0 0.0
      %1787 = vmatpush1.msra.mxu0 0.0
      %1788 = vmatprep.mubr.f32.mxu0 0.0
      %1789 = vmatmul.mubr.f32.gmra.mrb[0].mxu0 %v1714
      %v1790 = vpop.f32.mrb[0].mxu0
      %v1791 = vadd.f32 0.0, %v1790
      %v1792 = vpop.f32.mrb[0].mxu0
      %1793 = vmatprep.mubr.f32.mxu0 0.0
      %1794 = vmatmul.mubr.f32.gmra.mrb[0].mxu0 %v1717
      %v1795 = vpop.f32.mrb[0].mxu0
      %v1796 = vadd.f32 0.0, %v1795
      %v1797 = vpop.f32.mrb[0].mxu0
      %1798 = vmatprep.mubr.f32.mxu0 0.0
      %1799 = vmatmul.mubr.f32.gmra.mrb[0].mxu0 %v1720
      %v1800 = vpop.f32.mrb[0].mxu0
      %v1801 = vadd.f32 0.0, %v1800
      %v1802 = vpop.f32.mrb[0].mxu0
      %1803 = vdwg.mxu0
      %1807 = vrot.lane.b32.xlu0 %v1319, 8
      %v1808 = vpop.permute.xlu0 %1807
      %1809 = vrot.lane.b32.xlu0 %v1324, 8
      %v1810 = vpop.permute.xlu0 %1809
      %1811 = vrot.lane.b32.xlu0 %v1329, 8
      %v1812 = vpop.permute.xlu0 %1811
      %1819 = vrot.lane.b32.xlu0 %v1555, 16
      %v1820 = vpop.permute.xlu0 %1819
      %1821 = vrot.lane.b32.xlu0 %v1560, 16
      %v1822 = vpop.permute.xlu0 %1821
      %1823 = vrot.lane.b32.xlu0 %v1565, 16
      %v1824 = vpop.permute.xlu0 %1823
      %1831 = vrot.lane.b32.xlu0 %v1791, 24
      %v1832 = vpop.permute.xlu0 %1831
      %1833 = vrot.lane.b32.xlu0 %v1796, 24
      %v1834 = vpop.permute.xlu0 %1833
      %1835 = vrot.lane.b32.xlu0 %v1801, 24
      %v1836 = vpop.permute.xlu0 %1835
      %v1840 = vsel %vm868, %v1083, %v1808
      %v1841 = vsel %vm868, %v1088, %v1810
      %v1842 = vsel %vm868, %v1093, %v1812
      %vm1843 = vcmask 130048
      %v1844 = vsel %vm1843, %v1840, %v1820
      %v1845 = vsel %vm1843, %v1841, %v1822
      %v1846 = vsel %vm1843, %v1842, %v1824
      %vm1847 = vcmask 195584
      %v1848 = vsel %vm1847, %v1844, %v1832
      %v1849 = vsel %vm1847, %v1845, %v1834
      %v1850 = vsel %vm1847, %v1846, %v1836
      %v1851 = vld [vmem:[%s653] sm:$0xff]
      %v1852 = vld [vmem:[%s653 + $0x8] sm:$0xff]
      %v1853 = vld [vmem:[%s653 + $0x10] sm:$0xff]
      %v1854 = vld [vmem:[%s653 + $0x18] sm:$0xff]
      %v1856 = vsel %vm699, %v1848, 0
      %v1859 = vsel %vm699, %v1849, 0
      %v1862 = vsel %vm699, %v1850, 0
      %1864 = vmatprep.subr.mxu0 0.0
      %1865 = vmatpush1.msra.mxu0 %v1851
      %1866 = vmatprep.subr.mxu0 0.0
      %1867 = vmatpush1.msra.mxu0 %v1852
      %1868 = vmatprep.subr.mxu0 0.0
      %1869 = vmatpush1.msra.mxu0 %v1853
      %1870 = vmatprep.subr.mxu0 0.0
      %1871 = vmatpush1.msra.mxu0 %v1854
      %1872 = vmatprep.subr.mxu0 0.0
      %1873 = vmatpush1.msra.mxu0 0.0
      %1874 = vmatprep.subr.mxu0 0.0
      %1875 = vmatpush1.msra.mxu0 0.0
      %1876 = vmatprep.subr.mxu0 0.0
      %1877 = vmatpush1.msra.mxu0 0.0
      %1878 = vmatprep.subr.mxu0 0.0
      %1879 = vmatpush1.msra.mxu0 0.0
      %1880 = vmatprep.subr.mxu0 0.0
      %1881 = vmatpush1.msra.mxu0 0.0
      %1882 = vmatprep.subr.mxu0 0.0
      %1883 = vmatpush1.msra.mxu0 0.0
      %1884 = vmatprep.subr.mxu0 0.0
      %1885 = vmatpush1.msra.mxu0 0.0
      %1886 = vmatprep.subr.mxu0 0.0
      %1887 = vmatpush1.msra.mxu0 0.0
      %1888 = vmatprep.subr.mxu0 0.0
      %1889 = vmatpush1.msra.mxu0 0.0
      %1890 = vmatprep.subr.mxu0 0.0
      %1891 = vmatpush1.msra.mxu0 0.0
      %1892 = vmatprep.subr.mxu0 0.0
      %1893 = vmatpush1.msra.mxu0 0.0
      %1894 = vmatprep.subr.mxu0 0.0
      %1895 = vmatpush1.msra.mxu0 0.0
      %1896 = vmatprep.subr.mxu0 0.0
      %1897 = vmatpush1.msra.mxu0 0.0
      %1898 = vmatprep.subr.mxu0 0.0
      %1899 = vmatpush1.msra.mxu0 0.0
      %1900 = vmatprep.subr.mxu0 0.0
      %1901 = vmatpush1.msra.mxu0 0.0
      %1902 = vmatprep.subr.mxu0 0.0
      %1903 = vmatpush1.msra.mxu0 0.0
      %1904 = vmatprep.subr.mxu0 0.0
      %1905 = vmatpush1.msra.mxu0 0.0
      %1906 = vmatprep.subr.mxu0 0.0
      %1907 = vmatpush1.msra.mxu0 0.0
      %1908 = vmatprep.subr.mxu0 0.0
      %1909 = vmatpush1.msra.mxu0 0.0
      %1910 = vmatprep.subr.mxu0 0.0
      %1911 = vmatpush1.msra.mxu0 0.0
      %1912 = vmatprep.subr.mxu0 0.0
      %1913 = vmatpush1.msra.mxu0 0.0
      %1914 = vmatprep.subr.mxu0 0.0
      %1915 = vmatpush1.msra.mxu0 0.0
      %1916 = vmatprep.subr.mxu0 0.0
      %1917 = vmatpush1.msra.mxu0 0.0
      %1918 = vmatprep.subr.mxu0 0.0
      %1919 = vmatpush1.msra.mxu0 0.0
      %1920 = vmatprep.subr.mxu0 0.0
      %1921 = vmatpush1.msra.mxu0 0.0
      %1922 = vmatprep.subr.mxu0 0.0
      %1923 = vmatpush1.msra.mxu0 0.0
      %1924 = vmatprep.subr.mxu0 0.0
      %1925 = vmatpush1.msra.mxu0 0.0
      %1926 = vmatprep.subr.mxu0 0.0
      %1927 = vmatpush1.msra.mxu0 0.0
      %1928 = vmatprep.mubr.f32.mxu0 0.0
      %1929 = vmatmul.mubr.f32.gmra.mrb[0].mxu0 %v1856
      %v1930 = vpop.f32.mrb[0].mxu0
      %v1931 = vadd.f32 0.0, %v1930
      %v1932 = vpop.f32.mrb[0].mxu0
      %1933 = vmatprep.mubr.f32.mxu0 0.0
      %1934 = vmatmul.mubr.f32.gmra.mrb[0].mxu0 %v1859
      %v1935 = vpop.f32.mrb[0].mxu0
      %v1936 = vadd.f32 0.0, %v1935
      %v1937 = vpop.f32.mrb[0].mxu0
      %1938 = vmatprep.mubr.f32.mxu0 0.0
      %1939 = vmatmul.mubr.f32.gmra.mrb[0].mxu0 %v1862
      %v1940 = vpop.f32.mrb[0].mxu0
      %v1941 = vadd.f32 0.0, %v1940
      %v1942 = vpop.f32.mrb[0].mxu0
      %1943 = vdwg.mxu0
      %v1944 = vadd.f32 %v691, %v1931
      %v1945 = vadd.f32 %v692, %v1936
      %v1946 = vadd.f32 %v693, %v1941
      %v1947 = vld [vmem:[%s656] sm:$0x1]
      %v1949 = vlaneseq
      %v1950 = vshrl.u32 %v1949, 7
      %v1951 = vsub.s32 0, %v1950
      %v1952 = vrot.slane %v1947, %v1951
      %v1954 = vadd.f32 %v1944, %v1952
      %v1955 = vadd.f32 %v1945, %v1952
      %v1956 = vadd.f32 %v1946, %v1952
      %v1957 = vld [vmem:[%s659] sm:$0x1]
      %v1958 = vld [vmem:[%s662] sm:$0x1]
      %v1959 = vsel %vm699, %v1954, 0.0
      %1960 = vadd.xlane.f32.xlu0 %v1959
      %v1961 = vpop.xlane.xlu0 %1960
      %v1962 = vsel %vm699, %v1955, 0.0
      %1963 = vadd.xlane.f32.xlu0 %v1962
      %v1964 = vpop.xlane.xlu0 %1963
      %v1965 = vsel %vm706, %v1956, 0.0
      %1966 = vadd.xlane.f32.xlu0 %v1965
      %v1967 = vpop.xlane.xlu0 %1966
      %v1968 = vmul.f32 %v1961, %v710
      %v1969 = vmul.f32 %v1964, %v710
      %v1970 = vmul.f32 %v1967, %v710
      %v1971 = vsub.f32 %v1954, %v1968
      %v1972 = vsub.f32 %v1955, %v1969
      %v1973 = vsub.f32 %v1956, %v1970
      %v1974 = vmul.f32 %v1971, %v1971
      %v1975 = vmul.f32 %v1972, %v1972
      %v1976 = vmul.f32 %v1973, %v1973
      %v1977 = vsel %vm699, %v1974, 0.0
      %1978 = vadd.xlane.f32.xlu0 %v1977
      %v1979 = vpop.xlane.xlu0 %1978
      %v1980 = vsel %vm699, %v1975, 0.0
      %1981 = vadd.xlane.f32.xlu0 %v1980
      %v1982 = vpop.xlane.xlu0 %1981
      %v1983 = vsel %vm706, %v1976, 0.0
      %1984 = vadd.xlane.f32.xlu0 %v1983
      %v1985 = vpop.xlane.xlu0 %1984
      %v1986 = vmul.f32 %v1979, %v710
      %v1987 = vmul.f32 %v1982, %v710
      %v1988 = vmul.f32 %v1985, %v710
      %v1989 = vadd.f32 %v1986, 1e-05
      %v1990 = vadd.f32 %v1987, 1e-05
      %v1991 = vadd.f32 %v1988, 1e-05
      %v1992 = vrsqrt.pop %v1989
      %v1993 = vrsqrt.pop %v1990
      %v1994 = vrsqrt.pop %v1991
      %v1995 = vmul.f32 %v1971, %v1992
      %v1996 = vmul.f32 %v1972, %v1993
      %v1997 = vmul.f32 %v1973, %v1994
      %v1999 = vlaneseq
      %v2000 = vshrl.u32 %v1999, 7
      %v2001 = vsub.s32 0, %v2000
      %v2002 = vrot.slane %v1957, %v2001
      %v2004 = vmul.f32 %v1995, %v2002
      %v2005 = vmul.f32 %v1996, %v2002
      %v2006 = vmul.f32 %v1997, %v2002
      %v2008 = vlaneseq
      %v2009 = vshrl.u32 %v2008, 7
      %v2010 = vsub.s32 0, %v2009
      %v2011 = vrot.slane %v1958, %v2010
      %v2013 = vadd.f32 %v2004, %v2011
      %v2014 = vadd.f32 %v2005, %v2011
      %v2015 = vadd.f32 %v2006, %v2011
      %v2016 = vld [vmem:[%s667] sm:$0xff]
      %v2017 = vld [vmem:[%s667 + $0x8] sm:$0xff]
      %v2018 = vld [vmem:[%s667 + $0x10] sm:$0xff]
      %v2019 = vld [vmem:[%s667 + $0x18] sm:$0xff]
      %v2020 = vld [vmem:[%s670] sm:$0x1]
      %v2022 = vlaneseq
      %v2023 = vshrl.u32 %v2022, 7
      %v2024 = vsub.s32 0, %v2023
      %v2025 = vrot.slane %v2020, %v2024
      %v2028 = vsel %vm699, %v2013, 0
      %v2031 = vsel %vm699, %v2014, 0
      %v2034 = vsel %vm699, %v2015, 0
      %2036 = vmatprep.subr.mxu0 0.0
      %2037 = vmatpush1.msra.mxu0 %v2016
      %2038 = vmatprep.subr.mxu0 0.0
      %2039 = vmatpush1.msra.mxu0 %v2017
      %2040 = vmatprep.subr.mxu0 0.0
      %2041 = vmatpush1.msra.mxu0 %v2018
      %2042 = vmatprep.subr.mxu0 0.0
      %2043 = vmatpush1.msra.mxu0 %v2019
      %2044 = vmatprep.subr.mxu0 0.0
      %2045 = vmatpush1.msra.mxu0 0.0
      %2046 = vmatprep.subr.mxu0 0.0
      %2047 = vmatpush1.msra.mxu0 0.0
      %2048 = vmatprep.subr.mxu0 0.0
      %2049 = vmatpush1.msra.mxu0 0.0
      %2050 = vmatprep.subr.mxu0 0.0
      %2051 = vmatpush1.msra.mxu0 0.0
      %2052 = vmatprep.subr.mxu0 0.0
      %2053 = vmatpush1.msra.mxu0 0.0
      %2054 = vmatprep.subr.mxu0 0.0
      %2055 = vmatpush1.msra.mxu0 0.0
      %2056 = vmatprep.subr.mxu0 0.0
      %2057 = vmatpush1.msra.mxu0 0.0
      %2058 = vmatprep.subr.mxu0 0.0
      %2059 = vmatpush1.msra.mxu0 0.0
      %2060 = vmatprep.subr.mxu0 0.0
      %2061 = vmatpush1.msra.mxu0 0.0
      %2062 = vmatprep.subr.mxu0 0.0
      %2063 = vmatpush1.msra.mxu0 0.0
      %2064 = vmatprep.subr.mxu0 0.0
      %2065 = vmatpush1.msra.mxu0 0.0
      %2066 = vmatprep.subr.mxu0 0.0
      %2067 = vmatpush1.msra.mxu0 0.0
      %2068 = vmatprep.subr.mxu0 0.0
      %2069 = vmatpush1.msra.mxu0 0.0
      %2070 = vmatprep.subr.mxu0 0.0
      %2071 = vmatpush1.msra.mxu0 0.0
      %2072 = vmatprep.subr.mxu0 0.0
      %2073 = vmatpush1.msra.mxu0 0.0
      %2074 = vmatprep.subr.mxu0 0.0
      %2075 = vmatpush1.msra.mxu0 0.0
      %2076 = vmatprep.subr.mxu0 0.0
      %2077 = vmatpush1.msra.mxu0 0.0
      %2078 = vmatprep.subr.mxu0 0.0
      %2079 = vmatpush1.msra.mxu0 0.0
      %2080 = vmatprep.subr.mxu0 0.0
      %2081 = vmatpush1.msra.mxu0 0.0
      %2082 = vmatprep.subr.mxu0 0.0
      %2083 = vmatpush1.msra.mxu0 0.0
      %2084 = vmatprep.subr.mxu0 0.0
      %2085 = vmatpush1.msra.mxu0 0.0
      %2086 = vmatprep.subr.mxu0 0.0
      %2087 = vmatpush1.msra.mxu0 0.0
      %2088 = vmatprep.subr.mxu0 0.0
      %2089 = vmatpush1.msra.mxu0 0.0
      %2090 = vmatprep.subr.mxu0 0.0
      %2091 = vmatpush1.msra.mxu0 0.0
      %2092 = vmatprep.subr.mxu0 0.0
      %2093 = vmatpush1.msra.mxu0 0.0
      %2094 = vmatprep.subr.mxu0 0.0
      %2095 = vmatpush1.msra.mxu0 0.0
      %2096 = vmatprep.subr.mxu0 0.0
      %2097 = vmatpush1.msra.mxu0 0.0
      %2098 = vmatprep.subr.mxu0 0.0
      %2099 = vmatpush1.msra.mxu0 0.0
      %2100 = vmatprep.mubr.f32.mxu0 0.0
      %2101 = vmatmul.mubr.f32.gmra.mrb[0].mxu0 %v2028
      %v2102 = vpop.f32.mrb[0].mxu0
      %v2103 = vadd.f32 %v2025, %v2102
      %v2104 = vpop.f32.mrb[0].mxu0
      %2105 = vmatprep.mubr.f32.mxu0 0.0
      %2106 = vmatmul.mubr.f32.gmra.mrb[0].mxu0 %v2031
      %v2107 = vpop.f32.mrb[0].mxu0
      %v2108 = vadd.f32 %v2025, %v2107
      %v2109 = vpop.f32.mrb[0].mxu0
      %2110 = vmatprep.mubr.f32.mxu0 0.0
      %2111 = vmatmul.mubr.f32.gmra.mrb[0].mxu0 %v2034
      %v2112 = vpop.f32.mrb[0].mxu0
      %v2113 = vadd.f32 %v2025, %v2112
      %v2114 = vpop.f32.mrb[0].mxu0
      %2115 = vdwg.mxu0
      %v2116 = vmul.f32 %v2103, 0.5
      %v2117 = vmul.f32 %v2108, 0.5
      %v2118 = vmul.f32 %v2113, 0.5
      %v2119 = vmul.f32 %v2103, 0.044715
      %v2120 = vmul.f32 %v2108, 0.044715
      %v2121 = vmul.f32 %v2113, 0.044715
      %v2122 = vmul.f32 %v2119, %v2103
      %v2123 = vmul.f32 %v2120, %v2108
      %v2124 = vmul.f32 %v2121, %v2113
      %v2125 = vmul.f32 %v2122, %v2103
      %v2126 = vmul.f32 %v2123, %v2108
      %v2127 = vmul.f32 %v2124, %v2113
      %v2128 = vadd.f32 %v2103, %v2125
      %v2129 = vadd.f32 %v2108, %v2126
      %v2130 = vadd.f32 %v2113, %v2127
      %v2131 = vmul.f32 %v2128, 0.7978846
      %v2132 = vmul.f32 %v2129, 0.7978846
      %v2133 = vmul.f32 %v2130, 0.7978846
      %v2134 = vtanh.pop %v2131
      %v2135 = vtanh.pop %v2132
      %v2136 = vtanh.pop %v2133
      %v2137 = vadd.f32 %v2134, 1.0
      %v2138 = vadd.f32 %v2135, 1.0
      %v2139 = vadd.f32 %v2136, 1.0
      %v2140 = vmul.f32 %v2116, %v2137
      %v2141 = vmul.f32 %v2117, %v2138
      %v2142 = vmul.f32 %v2118, %v2139
      %v2143 = vld [vmem:[%s675] sm:$0xff]
      %v2144 = vld [vmem:[%s675 + $0x8] sm:$0xff]
      %v2145 = vld [vmem:[%s675 + $0x10] sm:$0xff]
      %v2146 = vld [vmem:[%s675 + $0x18] sm:$0xff]
      %v2147 = vld [vmem:[%s675 + $0x20] sm:$0xff]
      %v2148 = vld [vmem:[%s675 + $0x28] sm:$0xff]
      %v2149 = vld [vmem:[%s675 + $0x30] sm:$0xff]
      %v2150 = vld [vmem:[%s675 + $0x38] sm:$0xff]
      %v2151 = vld [vmem:[%s675 + $0x40] sm:$0xff]
      %v2152 = vld [vmem:[%s675 + $0x48] sm:$0xff]
      %v2153 = vld [vmem:[%s675 + $0x50] sm:$0xff]
      %v2154 = vld [vmem:[%s675 + $0x58] sm:$0xff]
      %v2155 = vld [vmem:[%s675 + $0x60] sm:$0xff]
      %v2156 = vld [vmem:[%s675 + $0x68] sm:$0xff]
      %v2157 = vld [vmem:[%s675 + $0x70] sm:$0xff]
      %v2158 = vld [vmem:[%s675 + $0x78] sm:$0xff]
      %2159 = vmatprep.subr.mxu0 0.0
      %2160 = vmatpush1.msra.mxu0 %v2143
      %2161 = vmatprep.subr.mxu0 0.0
      %2162 = vmatpush1.msra.mxu0 %v2144
      %2163 = vmatprep.subr.mxu0 0.0
      %2164 = vmatpush1.msra.mxu0 %v2145
      %2165 = vmatprep.subr.mxu0 0.0
      %2166 = vmatpush1.msra.mxu0 %v2146
      %2167 = vmatprep.subr.mxu0 0.0
      %2168 = vmatpush1.msra.mxu0 %v2147
      %2169 = vmatprep.subr.mxu0 0.0
      %2170 = vmatpush1.msra.mxu0 %v2148
      %2171 = vmatprep.subr.mxu0 0.0
      %2172 = vmatpush1.msra.mxu0 %v2149
      %2173 = vmatprep.subr.mxu0 0.0
      %2174 = vmatpush1.msra.mxu0 %v2150
      %2175 = vmatprep.subr.mxu0 0.0
      %2176 = vmatpush1.msra.mxu0 %v2151
      %2177 = vmatprep.subr.mxu0 0.0
      %2178 = vmatpush1.msra.mxu0 %v2152
      %2179 = vmatprep.subr.mxu0 0.0
      %2180 = vmatpush1.msra.mxu0 %v2153
      %2181 = vmatprep.subr.mxu0 0.0
      %2182 = vmatpush1.msra.mxu0 %v2154
      %2183 = vmatprep.subr.mxu0 0.0
      %2184 = vmatpush1.msra.mxu0 %v2155
      %2185 = vmatprep.subr.mxu0 0.0
      %2186 = vmatpush1.msra.mxu0 %v2156
      %2187 = vmatprep.subr.mxu0 0.0
      %2188 = vmatpush1.msra.mxu0 %v2157
      %2189 = vmatprep.subr.mxu0 0.0
      %2190 = vmatpush1.msra.mxu0 %v2158
      %2191 = vmatprep.subr.mxu0 0.0
      %2192 = vmatpush1.msra.mxu0 0.0
      %2193 = vmatprep.subr.mxu0 0.0
      %2194 = vmatpush1.msra.mxu0 0.0
      %2195 = vmatprep.subr.mxu0 0.0
      %2196 = vmatpush1.msra.mxu0 0.0
      %2197 = vmatprep.subr.mxu0 0.0
      %2198 = vmatpush1.msra.mxu0 0.0
      %2199 = vmatprep.subr.mxu0 0.0
      %2200 = vmatpush1.msra.mxu0 0.0
      %2201 = vmatprep.subr.mxu0 0.0
      %2202 = vmatpush1.msra.mxu0 0.0
      %2203 = vmatprep.subr.mxu0 0.0
      %2204 = vmatpush1.msra.mxu0 0.0
      %2205 = vmatprep.subr.mxu0 0.0
      %2206 = vmatpush1.msra.mxu0 0.0
      %2207 = vmatprep.subr.mxu0 0.0
      %2208 = vmatpush1.msra.mxu0 0.0
      %2209 = vmatprep.subr.mxu0 0.0
      %2210 = vmatpush1.msra.mxu0 0.0
      %2211 = vmatprep.subr.mxu0 0.0
      %2212 = vmatpush1.msra.mxu0 0.0
      %2213 = vmatprep.subr.mxu0 0.0
      %2214 = vmatpush1.msra.mxu0 0.0
      %2215 = vmatprep.subr.mxu0 0.0
      %2216 = vmatpush1.msra.mxu0 0.0
      %2217 = vmatprep.subr.mxu0 0.0
      %2218 = vmatpush1.msra.mxu0 0.0
      %2219 = vmatprep.subr.mxu0 0.0
      %2220 = vmatpush1.msra.mxu0 0.0
      %2221 = vmatprep.subr.mxu0 0.0
      %2222 = vmatpush1.msra.mxu0 0.0
      %2223 = vmatprep.mubr.f32.mxu0 0.0
      %2224 = vmatmul.mubr.f32.gmra.mrb[0].mxu0 %v2140
      %v2225 = vpop.f32.mrb[0].mxu0
      %v2226 = vadd.f32 0.0, %v2225
      %v2227 = vpop.f32.mrb[0].mxu0
      %2228 = vmatprep.mubr.f32.mxu0 0.0
      %2229 = vmatmul.mubr.f32.gmra.mrb[0].mxu0 %v2141
      %v2230 = vpop.f32.mrb[0].mxu0
      %v2231 = vadd.f32 0.0, %v2230
      %v2232 = vpop.f32.mrb[0].mxu0
      %2233 = vmatprep.mubr.f32.mxu0 0.0
      %2234 = vmatmul.mubr.f32.gmra.mrb[0].mxu0 %v2142
      %v2235 = vpop.f32.mrb[0].mxu0
      %v2236 = vadd.f32 0.0, %v2235
      %v2237 = vpop.f32.mrb[0].mxu0
      %2238 = vdwg.mxu0
      %v2239 = vadd.f32 %v1954, %v2226
      %v2240 = vadd.f32 %v1955, %v2231
      %v2241 = vadd.f32 %v1956, %v2236
      %v2242 = vld [vmem:[%s678] sm:$0x1]
      %v2244 = vlaneseq
      %v2245 = vshrl.u32 %v2244, 7
      %v2246 = vsub.s32 0, %v2245
      %v2247 = vrot.slane %v2242, %v2246
      %v2249 = vadd.f32 %v2239, %v2247
      %v2250 = vadd.f32 %v2240, %v2247
      %v2251 = vadd.f32 %v2241, %v2247
      %2252 = vst.msk [vmem:[#allocation2] sm:$0xff] %vm699, %v2249
      %2253 = vst.msk [vmem:[#allocation2 + $0x8] sm:$0xff] %vm699, %v2250
      %2254 = vst.msk [vmem:[#allocation2 + $0x10] sm:$0xf] %vm706, %v2251
      %p2255 = scmp.eq.s32.totalorder %s27, 1
      // Predicated region
      $region89: #{esm_wrapper_forward.1} parent=83 // pred_check
        %p2256 = pneg %p2255
      $region90: #{esm_wrapper_forward.1} parent=83 // pred_check_branch
        %2258 = sbr.rel (%p2256) target = $region92
      $region91: #{esm_wrapper_forward.1} parent=83 // pred_region
        %v2259 = vld [vmem:[%s14] sm:$0x1]
        %v2260 = vld [vmem:[%s15] sm:$0x1]
        %v2261 = vsel %vm699, %v2249, 0.0
        %2262 = vadd.xlane.f32.xlu0 %v2261
        %v2263 = vpop.xlane.xlu0 %2262
        %v2264 = vsel %vm699, %v2250, 0.0
        %2265 = vadd.xlane.f32.xlu0 %v2264
        %v2266 = vpop.xlane.xlu0 %2265
        %v2267 = vsel %vm706, %v2251, 0.0
        %2268 = vadd.xlane.f32.xlu0 %v2267
        %v2269 = vpop.xlane.xlu0 %2268
        %v2270 = vmul.f32 %v2263, %v710
        %v2271 = vmul.f32 %v2266, %v710
        %v2272 = vmul.f32 %v2269, %v710
        %v2273 = vsub.f32 %v2249, %v2270
        %v2274 = vsub.f32 %v2250, %v2271
        %v2275 = vsub.f32 %v2251, %v2272
        %v2276 = vmul.f32 %v2273, %v2273
        %v2277 = vmul.f32 %v2274, %v2274
        %v2278 = vmul.f32 %v2275, %v2275
        %v2279 = vsel %vm699, %v2276, 0.0
        %2280 = vadd.xlane.f32.xlu0 %v2279
        %v2281 = vpop.xlane.xlu0 %2280
        %v2282 = vsel %vm699, %v2277, 0.0
        %2283 = vadd.xlane.f32.xlu0 %v2282
        %v2284 = vpop.xlane.xlu0 %2283
        %v2285 = vsel %vm706, %v2278, 0.0
        %2286 = vadd.xlane.f32.xlu0 %v2285
        %v2287 = vpop.xlane.xlu0 %2286
        %v2288 = vmul.f32 %v2281, %v710
        %v2289 = vmul.f32 %v2284, %v710
        %v2290 = vmul.f32 %v2287, %v710
        %v2291 = vadd.f32 %v2288, 1e-05
        %v2292 = vadd.f32 %v2289, 1e-05
        %v2293 = vadd.f32 %v2290, 1e-05
        %v2294 = vrsqrt.pop %v2291
        %v2295 = vrsqrt.pop %v2292
        %v2296 = vrsqrt.pop %v2293
        %v2297 = vmul.f32 %v2273, %v2294
        %v2298 = vmul.f32 %v2274, %v2295
        %v2299 = vmul.f32 %v2275, %v2296
        %v2301 = vlaneseq
        %v2302 = vshrl.u32 %v2301, 7
        %v2303 = vsub.s32 0, %v2302
        %v2304 = vrot.slane %v2259, %v2303
        %v2306 = vmul.f32 %v2297, %v2304
        %v2307 = vmul.f32 %v2298, %v2304
        %v2308 = vmul.f32 %v2299, %v2304
        %v2310 = vlaneseq
        %v2311 = vshrl.u32 %v2310, 7
        %v2312 = vsub.s32 0, %v2311
        %v2313 = vrot.slane %v2260, %v2312
        %v2315 = vadd.f32 %v2306, %v2313
        %v2316 = vadd.f32 %v2307, %v2313
        %v2317 = vadd.f32 %v2308, %v2313
        %2318 = vst.msk [vmem:[%s16] sm:$0xff] %vm699, %v2315
        %2319 = vst.msk [vmem:[%s16 + $0x8] sm:$0xff] %vm699, %v2316
        %2320 = vst.msk [vmem:[%s16 + $0x10] sm:$0xf] %vm706, %v2317
      $region92: #{esm_wrapper_forward.1} parent=83 // pred_fallthru
        _
      // Predicated region
      $region93: #{esm_wrapper_forward.1} parent=83 // pred_check
        %p2321 = pneg %p436
      $region94: #{esm_wrapper_forward.1} parent=83 // pred_check_branch
        %2323 = sbr.rel (%p2321) target = $region96
      $region95: #{esm_wrapper_forward.1} parent=83 // pred_region
        _
      $region96: #{esm_wrapper_forward.1} parent=83 // pred_fallthru
        _
      // Predicated region
      $region97: #{esm_wrapper_forward.1} parent=83 // pred_check
        %p2324 = pneg %p436
      $region98: #{esm_wrapper_forward.1} parent=83 // pred_check_branch
        %2326 = sbr.rel (%p2324) target = $region100
      $region99: #{esm_wrapper_forward.1} parent=83 // pred_region
        _
      $region100: #{esm_wrapper_forward.1} parent=83 // pred_fallthru
        _
    $region84: #{esm_wrapper_forward.1} parent=5 // pred_fallthru
      _
    %p2327 = scmp.le.s32.totalorder 2, %s22
    // Predicated region
    $region101: #{esm_wrapper_forward.1} parent=5 // pred_check
      %p2328 = pneg %p2327
    $region102: #{esm_wrapper_forward.1} parent=5 // pred_check_branch
      %2330 = sbr.rel (%p2328) target = $region104
    $region103: #{esm_wrapper_forward.1} parent=5 // pred_region
      %s2331 = ssub.s32 %s22, 2
    $region104: #{esm_wrapper_forward.1} parent=5 // pred_fallthru
      _
  $region6: #{esm_wrapper_forward.1} parent=0 // loop_footer
    %s26 = sadd.s32 1, %s22
  $region7: #{esm_wrapper_forward.1} parent=0 // loop_footer_branch
    %21 = sbr.rel target = $region3
  $region8: #{esm_wrapper_forward.1} parent=0 // loop_exit
    _

</llo_original>
